<compile_context>
chip_gen: v5e
topology: v5e:2x2
jax: 0.10.0
libtpu: 0.0.40
codegen_flags: <defaults>
</compile_context>

<pallas_src>
import jax
import jax.numpy as jnp
from jax import lax
from jax.experimental import pallas as pl
from jax.experimental.pallas import tpu as pltpu

KERNEL_SIZE = 3
STRIDE = 2
PAD = 1


# ---------------------------------------------------------------------------
# Kernel
# ---------------------------------------------------------------------------
def _make_conv_kernel(nb, h_out, w_out):
    """relu( sum_{kh,kw} x_tap @ W[kh,kw] + bias ) for `nb` images per step."""

    def kernel(x_ref, w_ref, b_ref, o_ref):
        # x_ref: (nb, 2, 2, Hq, Wq, C_total)  bf16  stride-2 phase-split input
        #        x_ref[b, ph, pw, i, j, c] == x_pad[b, 2i+ph, 2j+pw, c]
        # w_ref: (3, 3, C_total, C_out)       bf16
        # b_ref: (1, C_out)                   f32
        # o_ref: (nb, H_out, W_out, C_out)    bf16
        c_tot = w_ref.shape[2]
        c_out = w_ref.shape[3]
        bias = b_ref[...]                                      # (1, C_out)

        # Hoist the per-tap weight broadcasts out of all loops (JAX does not
        # CSE broadcast_in_dim): batch dim = output row for the batched dot.
        wts = [[jnp.broadcast_to(w_ref[kh, kw], (h_out, c_tot, c_out))
                for kw in range(KERNEL_SIZE)] for kh in range(KERNEL_SIZE)]

        for b in range(nb):                                    # unrolled
            acc = jnp.zeros((h_out, w_out, c_out), jnp.float32)
            for kh in range(KERNEL_SIZE):
                ph, ih = kh % 2, kh // 2
                for kw in range(KERNEL_SIZE):
                    pw, iw = kw % 2, kw // 2
                    # x_pad[b, 2*ho+kh, 2*wo+kw, :] for all (ho, wo): a static
                    # unit-stride window of the phase-split block (in-kernel
                    # im2col, nothing materialized in HBM).
                    xt = x_ref[b, ph, pw,
                               pl.ds(ih, h_out), pl.ds(iw, w_out), :]
                    # Batched matmul (batch = output row) on the MXU,
                    # f32 accumulation.
                    acc = acc + lax.dot_general(
                        xt, wts[kh][kw],
                        (((2,), (1,)), ((0,), (0,))),
                        preferred_element_type=jnp.float32)
            acc = acc + bias                                   # (1,Cout) bcast
            o_ref[b] = jnp.maximum(acc, 0.0).astype(o_ref.dtype)

    return kernel


# ---------------------------------------------------------------------------
# Wrapper helpers
# ---------------------------------------------------------------------------
def _is_single_tensorcore_chip():
    """v5e / v6e have one TensorCore; default to multi-TC when unknown."""
    try:
        kind = jax.devices()[0].device_kind.lower()
    except Exception:
        return False
    return any(tag in kind for tag in ("v5e", "v5 lite", "v5lite",
                                       "v6e", "v6 lite", "v6lite"))


def _pick_batch_block(n, rows_per_image, target_rows=2048):
    """Images per grid step: as many as the row target allows; only force >=2
    grid blocks on multi-TC chips (v7x megacore) so both cores get work."""
    divisors = [d for d in range(1, n + 1) if n % d == 0]
    nb = 1
    for d in divisors:
        if d * rows_per_image <= target_rows:
            nb = d
    if not _is_single_tensorcore_chip() and n >= 2:
        while n // nb < 2 and nb > 1:
            nb = max(d for d in divisors if d < nb)
    return nb


def _tile_padded_bytes(shape, dtype):
    """VMEM bytes of a block once its minor two dims are layout-padded."""
    dt = jnp.dtype(dtype)
    sub = {4: 8, 2: 16, 1: 32}.get(dt.itemsize, 8)
    lead = 1
    for d in shape[:-2]:
        lead *= int(d)
    s2 = -(-int(shape[-2]) // sub) * sub
    s1 = -(-int(shape[-1]) // 128) * 128
    return lead * s2 * s1 * dt.itemsize


def pnn_conv_fused(x_nchw, w_taps, bias):
    """Fused 3x3 / stride-2 / pad-1 conv + bias + ReLU.  Returns NHWC bf16."""
    n, c_tot, h, w = x_nchw.shape
    k = KERNEL_SIZE
    c_out = w_taps.shape[-1]
    h_out = (h + 2 * PAD - k) // STRIDE + 1
    w_out = (w + 2 * PAD - k) // STRIDE + 1
    hq, wq = h_out + 1, w_out + 1          # per-phase spatial extent

    # Cheap pre-pass (one fused XLA copy, no im2col expansion): channel-last
    # bf16, zero-pad to an even (2*hq, 2*wq) spatial extent, then split into
    # the four stride-2 phases:  xph[n,ph,pw,i,j,c] == x_pad[n, 2i+ph, 2j+pw, c]
    xp = jnp.pad(x_nchw.transpose(0, 2, 3, 1).astype(jnp.bfloat16),
                 ((0, 0),
                  (PAD, 2 * hq - h - PAD),
                  (PAD, 2 * wq - w - PAD),
                  (0, 0)))
    xph = xp.reshape(n, hq, 2, wq, 2, c_tot).transpose(0, 2, 4, 1, 3, 5)

    w_taps = w_taps.astype(jnp.bfloat16)                 # (3, 3, C_tot, C_out)
    bias_row = bias.reshape(1, c_out).astype(jnp.float32)

    nb = _pick_batch_block(n, h_out * w_out)
    grid = (n // nb,)

    x_spec = pl.BlockSpec((nb, 2, 2, hq, wq, c_tot),
                          lambda i: (i, 0, 0, 0, 0, 0))
    w_spec = pl.BlockSpec((k, k, c_tot, c_out), lambda i: (0, 0, 0, 0))
    b_spec = pl.BlockSpec((1, c_out), lambda i: (0, 0))
    o_spec = pl.BlockSpec((nb, h_out, w_out, c_out), lambda i: (i, 0, 0, 0))

    # Per-step VMEM footprint (double-buffered), with minor-dim layout padding.
    need = 2 * (_tile_padded_bytes((nb * 4 * hq, wq, c_tot), jnp.bfloat16)
                + _tile_padded_bytes((nb * h_out, w_out, c_out), jnp.bfloat16)
                + _tile_padded_bytes((k * k, c_tot, c_out), jnp.bfloat16)
                + _tile_padded_bytes((1, c_out), jnp.float32))
    vmem_limit = int(min(48 * 2 ** 20, max(8 * 2 ** 20, 2 * need)))

    return pl.pallas_call(
        _make_conv_kernel(nb, h_out, w_out),
        out_shape=jax.ShapeDtypeStruct((n, h_out, w_out, c_out), jnp.bfloat16),
        grid=grid,
        in_specs=[x_spec, w_spec, b_spec],
        out_specs=o_spec,
        compiler_params=pltpu.CompilerParams(
            dimension_semantics=("parallel",),
            vmem_limit_bytes=vmem_limit),
    )(xph, w_taps, bias_row)


@jax.jit
def _pnn_forward(branch_x, branch_w, bias):
    x_cat = jnp.concatenate(branch_x, axis=1)        # [N, C_total, H, W]
    w_cat = jnp.concatenate(branch_w, axis=2)        # [3, 3, C_total, C_out]
    out_nhwc = pnn_conv_fused(x_cat, w_cat, bias)    # [N, Ho, Wo, C_out] bf16
    # TODO(synk): let NHWC/bf16 consumers take out_nhwc directly and skip this
    # extra transpose+cast pass over the output.
    return out_nhwc.transpose(0, 3, 1, 2).astype(jnp.float32)


# ---------------------------------------------------------------------------
# Module
# ---------------------------------------------------------------------------
class PNNConvLayerPallas:
    """JAX/Pallas equivalent of sequoia PNNConvLayer forward."""

    def __init__(self, col, depth, n_in, n_out, kernel_size=3, *, key):
        assert kernel_size == KERNEL_SIZE
        self.col = col
        self.n_in = n_in
        self.n_out = n_out
        n_lateral = col if depth > 0 else 0
        n_convs = 1 + n_lateral
        keys = jax.random.split(key, 2 * n_convs)
        fan_in = n_in * kernel_size * kernel_size
        bound = 1.0 / (fan_in ** 0.5)        # PyTorch Conv2d default init range
        self.weights = []                    # each [C_out, C_in, KH, KW] f32
        self.biases = []                     # each [C_out] f32
        self.wtaps_bf16 = []                 # each [KH, KW, C_in, C_out] bf16
        for i in range(n_convs):
            wk, bk = keys[2 * i], keys[2 * i + 1]
            wgt = jax.random.uniform(
                wk, (n_out, n_in, kernel_size, kernel_size),
                jnp.float32, -bound, bound)
            b = jax.random.uniform(bk, (n_out,), jnp.float32, -bound, bound)
            self.weights.append(wgt)
            self.biases.append(b)
            # tap-major layout, ready for channel-axis concat across branches
            self.wtaps_bf16.append(wgt.transpose(2, 3, 1, 0).astype(jnp.bfloat16))
        # weights[0]/biases[0] -> self.layer ; [1:] -> self.u laterals

    def __call__(self, inputs):
        if not isinstance(inputs, (list, tuple)):
            inputs = [inputs]
        n_lateral = len(self.weights) - 1
        n_lat_used = min(n_lateral, len(inputs))   # zip(self.u, inputs) semantics

        branch_x = [inputs[-1]] + [inputs[i] for i in range(n_lat_used)]
        branch_w = [self.wtaps_bf16[0]] + [self.wtaps_bf16[1 + i]
                                           for i in range(n_lat_used)]
        bias = self.biases[0]
        for i in range(n_lat_used):
            bias = bias + self.biases[1 + i]

        return _pnn_forward(branch_x, branch_w, bias)   # NCHW f32


# ---------------------------------------------------------------------------
# Reference + self-test
# ---------------------------------------------------------------------------
def _ref_conv(x, w, b):
    out = lax.conv_general_dilated(
        x, w, window_strides=(STRIDE, STRIDE),
        padding=((PAD, PAD), (PAD, PAD)),
        dimension_numbers=("NCHW", "OIHW", "NCHW"),
        precision=lax.Precision.HIGHEST)
    return out + b.reshape(1, -1, 1, 1)


def _bf16_round(x):
    return x.astype(jnp.bfloat16).astype(jnp.float32)


if __name__ == "__main__":
    key = jax.random.PRNGKey(0)
    k_layer, k_x0, k_x1, k_x2 = jax.random.split(key, 4)

    # col=2, depth=1  ->  1 main conv + 2 lateral convs, 3 column inputs.
    col, depth, n_in, n_out = 2, 1, 4, 8
    N, H, W = 2, 16, 16

    layer = PNNConvLayerPallas(col, depth, n_in, n_out, key=k_layer)

    inputs = [
        jax.random.normal(k_x0, (N, n_in, H, W), jnp.float32),
        jax.random.normal(k_x1, (N, n_in, H, W), jnp.float32),
        jax.random.normal(k_x2, (N, n_in, H, W), jnp.float32),
    ]

    out = jax.block_until_ready(layer(inputs))

    # Pure-JAX reference (PyTorch forward semantics), with inputs/weights
    # rounded to bf16 to match the kernel's bf16-operand / f32-accumulate math.
    ref = _ref_conv(_bf16_round(inputs[-1]), _bf16_round(layer.weights[0]),
                    layer.biases[0])
    ref = ref + _ref_conv(_bf16_round(inputs[0]), _bf16_round(layer.weights[1]),
                          layer.biases[1])
    ref = ref + _ref_conv(_bf16_round(inputs[1]), _bf16_round(layer.weights[2]),
                          layer.biases[2])
    ref = jnp.maximum(ref, 0.0)

    assert out.shape == (N, n_out, H // 2, W // 2), out.shape
    err = float(jnp.max(jnp.abs(out - ref)))
    assert jnp.allclose(out, ref, rtol=2e-2, atol=2e-2), err
    print("KERNEL_OK")
</pallas_src>

<mosaic_0001>
module attributes {stable_mosaic.version = 11 : i64} {
  func.func @kernel(%arg0: i32, %arg1: memref<1x2x2x9x9x12xbf16, #tpu.memory_space<vmem>>, %arg2: memref<3x3x12x8xbf16, #tpu.memory_space<vmem>>, %arg3: memref<1x8xf32, #tpu.memory_space<vmem>>, %arg4: memref<1x8x8x8xbf16, #tpu.memory_space<vmem>>) attributes {dimension_semantics = [#tpu.dimension_semantics<parallel>], iteration_bounds = array<i64: 2>, scalar_prefetch = 0 : i64, scratch_operands = 0 : i64, tpu.core_type = #tpu.core_type<tc>, window_params = [{transform_indices = @transform_0, window_bounds = array<i64: 1, 2, 2, 9, 9, 12>}, {pipeline_mode = #tpu.pipeline_mode<synchronous>, transform_indices = @transform_1, window_bounds = array<i64: 3, 3, 12, 8>}, {pipeline_mode = #tpu.pipeline_mode<synchronous>, transform_indices = @transform_2, window_bounds = array<i64: 1, 8>}, {transform_indices = @transform_3, window_bounds = array<i64: 1, 8, 8, 8>}]} {
    %c0 = arith.constant 0 : index
    %c0_0 = arith.constant 0 : index
    %0 = vector.load %arg3[%c0, %c0_0] : memref<1x8xf32, #tpu.memory_space<vmem>>, vector<1x8xf32>
    %c0_1 = arith.constant 0 : index
    %c0_2 = arith.constant 0 : index
    %c0_3 = arith.constant 0 : index
    %c0_4 = arith.constant 0 : index
    %1 = vector.load %arg2[%c0_1, %c0_2, %c0_3, %c0_4] : memref<3x3x12x8xbf16, #tpu.memory_space<vmem>>, vector<1x1x12x8xbf16>
    %2 = vector.shape_cast %1 : vector<1x1x12x8xbf16> to vector<12x8xbf16>
    %3 = vector.shape_cast %2 : vector<12x8xbf16> to vector<1x12x8xbf16>
    %4 = vector.broadcast %3 : vector<1x12x8xbf16> to vector<8x12x8xbf16>
    %c0_5 = arith.constant 0 : index
    %c1 = arith.constant 1 : index
    %c0_6 = arith.constant 0 : index
    %c0_7 = arith.constant 0 : index
    %5 = vector.load %arg2[%c0_5, %c1, %c0_6, %c0_7] : memref<3x3x12x8xbf16, #tpu.memory_space<vmem>>, vector<1x1x12x8xbf16>
    %6 = vector.shape_cast %5 : vector<1x1x12x8xbf16> to vector<12x8xbf16>
    %7 = vector.shape_cast %6 : vector<12x8xbf16> to vector<1x12x8xbf16>
    %8 = vector.broadcast %7 : vector<1x12x8xbf16> to vector<8x12x8xbf16>
    %c0_8 = arith.constant 0 : index
    %c2 = arith.constant 2 : index
    %c0_9 = arith.constant 0 : index
    %c0_10 = arith.constant 0 : index
    %9 = vector.load %arg2[%c0_8, %c2, %c0_9, %c0_10] : memref<3x3x12x8xbf16, #tpu.memory_space<vmem>>, vector<1x1x12x8xbf16>
    %10 = vector.shape_cast %9 : vector<1x1x12x8xbf16> to vector<12x8xbf16>
    %11 = vector.shape_cast %10 : vector<12x8xbf16> to vector<1x12x8xbf16>
    %12 = vector.broadcast %11 : vector<1x12x8xbf16> to vector<8x12x8xbf16>
    %c1_11 = arith.constant 1 : index
    %c0_12 = arith.constant 0 : index
    %c0_13 = arith.constant 0 : index
    %c0_14 = arith.constant 0 : index
    %13 = vector.load %arg2[%c1_11, %c0_12, %c0_13, %c0_14] : memref<3x3x12x8xbf16, #tpu.memory_space<vmem>>, vector<1x1x12x8xbf16>
    %14 = vector.shape_cast %13 : vector<1x1x12x8xbf16> to vector<12x8xbf16>
    %15 = vector.shape_cast %14 : vector<12x8xbf16> to vector<1x12x8xbf16>
    %16 = vector.broadcast %15 : vector<1x12x8xbf16> to vector<8x12x8xbf16>
    %c1_15 = arith.constant 1 : index
    %c1_16 = arith.constant 1 : index
    %c0_17 = arith.constant 0 : index
    %c0_18 = arith.constant 0 : index
    %17 = vector.load %arg2[%c1_15, %c1_16, %c0_17, %c0_18] : memref<3x3x12x8xbf16, #tpu.memory_space<vmem>>, vector<1x1x12x8xbf16>
    %18 = vector.shape_cast %17 : vector<1x1x12x8xbf16> to vector<12x8xbf16>
    %19 = vector.shape_cast %18 : vector<12x8xbf16> to vector<1x12x8xbf16>
    %20 = vector.broadcast %19 : vector<1x12x8xbf16> to vector<8x12x8xbf16>
    %c1_19 = arith.constant 1 : index
    %c2_20 = arith.constant 2 : index
    %c0_21 = arith.constant 0 : index
    %c0_22 = arith.constant 0 : index
    %21 = vector.load %arg2[%c1_19, %c2_20, %c0_21, %c0_22] : memref<3x3x12x8xbf16, #tpu.memory_space<vmem>>, vector<1x1x12x8xbf16>
    %22 = vector.shape_cast %21 : vector<1x1x12x8xbf16> to vector<12x8xbf16>
    %23 = vector.shape_cast %22 : vector<12x8xbf16> to vector<1x12x8xbf16>
    %24 = vector.broadcast %23 : vector<1x12x8xbf16> to vector<8x12x8xbf16>
    %c2_23 = arith.constant 2 : index
    %c0_24 = arith.constant 0 : index
    %c0_25 = arith.constant 0 : index
    %c0_26 = arith.constant 0 : index
    %25 = vector.load %arg2[%c2_23, %c0_24, %c0_25, %c0_26] : memref<3x3x12x8xbf16, #tpu.memory_space<vmem>>, vector<1x1x12x8xbf16>
    %26 = vector.shape_cast %25 : vector<1x1x12x8xbf16> to vector<12x8xbf16>
    %27 = vector.shape_cast %26 : vector<12x8xbf16> to vector<1x12x8xbf16>
    %28 = vector.broadcast %27 : vector<1x12x8xbf16> to vector<8x12x8xbf16>
    %c2_27 = arith.constant 2 : index
    %c1_28 = arith.constant 1 : index
    %c0_29 = arith.constant 0 : index
    %c0_30 = arith.constant 0 : index
    %29 = vector.load %arg2[%c2_27, %c1_28, %c0_29, %c0_30] : memref<3x3x12x8xbf16, #tpu.memory_space<vmem>>, vector<1x1x12x8xbf16>
    %30 = vector.shape_cast %29 : vector<1x1x12x8xbf16> to vector<12x8xbf16>
    %31 = vector.shape_cast %30 : vector<12x8xbf16> to vector<1x12x8xbf16>
    %32 = vector.broadcast %31 : vector<1x12x8xbf16> to vector<8x12x8xbf16>
    %c2_31 = arith.constant 2 : index
    %c2_32 = arith.constant 2 : index
    %c0_33 = arith.constant 0 : index
    %c0_34 = arith.constant 0 : index
    %33 = vector.load %arg2[%c2_31, %c2_32, %c0_33, %c0_34] : memref<3x3x12x8xbf16, #tpu.memory_space<vmem>>, vector<1x1x12x8xbf16>
    %34 = vector.shape_cast %33 : vector<1x1x12x8xbf16> to vector<12x8xbf16>
    %35 = vector.shape_cast %34 : vector<12x8xbf16> to vector<1x12x8xbf16>
    %36 = vector.broadcast %35 : vector<1x12x8xbf16> to vector<8x12x8xbf16>
    %cst = arith.constant 0.000000e+00 : f32
    %37 = vector.broadcast %cst : f32 to vector<8x8x8xf32>
    %c0_35 = arith.constant 0 : index
    %c0_36 = arith.constant 0 : index
    %c0_37 = arith.constant 0 : index
    %c0_38 = arith.constant 0 : index
    %c0_39 = arith.constant 0 : index
    %c0_40 = arith.constant 0 : index
    %38 = vector.load %arg1[%c0_35, %c0_36, %c0_37, %c0_38, %c0_39, %c0_40] : memref<1x2x2x9x9x12xbf16, #tpu.memory_space<vmem>>, vector<1x1x1x8x8x12xbf16>
    %39 = vector.shape_cast %38 : vector<1x1x1x8x8x12xbf16> to vector<8x8x12xbf16>
    %cst_41 = arith.constant dense<0.000000e+00> : vector<8x8x8xf32>
    %40 = tpu.matmul %39, %4, %cst_41 {dimension_numbers = #tpu.dot_dimension_numbers<[2], [1], [1], [2], [0, 0, 0, 1, 1, 2], [0], [0]>} : vector<8x8x12xbf16>, vector<8x12x8xbf16>, vector<8x8x8xf32> -> vector<8x8x8xf32>
    %41 = arith.addf %37, %40 : vector<8x8x8xf32>
    %c0_42 = arith.constant 0 : index
    %c0_43 = arith.constant 0 : index
    %c1_44 = arith.constant 1 : index
    %c0_45 = arith.constant 0 : index
    %c0_46 = arith.constant 0 : index
    %c0_47 = arith.constant 0 : index
    %42 = vector.load %arg1[%c0_42, %c0_43, %c1_44, %c0_45, %c0_46, %c0_47] : memref<1x2x2x9x9x12xbf16, #tpu.memory_space<vmem>>, vector<1x1x1x8x8x12xbf16>
    %43 = vector.shape_cast %42 : vector<1x1x1x8x8x12xbf16> to vector<8x8x12xbf16>
    %cst_48 = arith.constant dense<0.000000e+00> : vector<8x8x8xf32>
    %44 = tpu.matmul %43, %8, %cst_48 {dimension_numbers = #tpu.dot_dimension_numbers<[2], [1], [1], [2], [0, 0, 0, 1, 1, 2], [0], [0]>} : vector<8x8x12xbf16>, vector<8x12x8xbf16>, vector<8x8x8xf32> -> vector<8x8x8xf32>
    %45 = arith.addf %41, %44 : vector<8x8x8xf32>
    %c0_49 = arith.constant 0 : index
    %c0_50 = arith.constant 0 : index
    %c0_51 = arith.constant 0 : index
    %c0_52 = arith.constant 0 : index
    %c1_53 = arith.constant 1 : index
    %c0_54 = arith.constant 0 : index
    %46 = vector.load %arg1[%c0_49, %c0_50, %c0_51, %c0_52, %c1_53, %c0_54] : memref<1x2x2x9x9x12xbf16, #tpu.memory_space<vmem>>, vector<1x1x1x8x8x12xbf16>
    %47 = vector.shape_cast %46 : vector<1x1x1x8x8x12xbf16> to vector<8x8x12xbf16>
    %cst_55 = arith.constant dense<0.000000e+00> : vector<8x8x8xf32>
    %48 = tpu.matmul %47, %12, %cst_55 {dimension_numbers = #tpu.dot_dimension_numbers<[2], [1], [1], [2], [0, 0, 0, 1, 1, 2], [0], [0]>} : vector<8x8x12xbf16>, vector<8x12x8xbf16>, vector<8x8x8xf32> -> vector<8x8x8xf32>
    %49 = arith.addf %45, %48 : vector<8x8x8xf32>
    %c0_56 = arith.constant 0 : index
    %c1_57 = arith.constant 1 : index
    %c0_58 = arith.constant 0 : index
    %c0_59 = arith.constant 0 : index
    %c0_60 = arith.constant 0 : index
    %c0_61 = arith.constant 0 : index
    %50 = vector.load %arg1[%c0_56, %c1_57, %c0_58, %c0_59, %c0_60, %c0_61] : memref<1x2x2x9x9x12xbf16, #tpu.memory_space<vmem>>, vector<1x1x1x8x8x12xbf16>
    %51 = vector.shape_cast %50 : vector<1x1x1x8x8x12xbf16> to vector<8x8x12xbf16>
    %cst_62 = arith.constant dense<0.000000e+00> : vector<8x8x8xf32>
    %52 = tpu.matmul %51, %16, %cst_62 {dimension_numbers = #tpu.dot_dimension_numbers<[2], [1], [1], [2], [0, 0, 0, 1, 1, 2], [0], [0]>} : vector<8x8x12xbf16>, vector<8x12x8xbf16>, vector<8x8x8xf32> -> vector<8x8x8xf32>
    %53 = arith.addf %49, %52 : vector<8x8x8xf32>
    %c0_63 = arith.constant 0 : index
    %c1_64 = arith.constant 1 : index
    %c1_65 = arith.constant 1 : index
    %c0_66 = arith.constant 0 : index
    %c0_67 = arith.constant 0 : index
    %c0_68 = arith.constant 0 : index
    %54 = vector.load %arg1[%c0_63, %c1_64, %c1_65, %c0_66, %c0_67, %c0_68] : memref<1x2x2x9x9x12xbf16, #tpu.memory_space<vmem>>, vector<1x1x1x8x8x12xbf16>
    %55 = vector.shape_cast %54 : vector<1x1x1x8x8x12xbf16> to vector<8x8x12xbf16>
    %cst_69 = arith.constant dense<0.000000e+00> : vector<8x8x8xf32>
    %56 = tpu.matmul %55, %20, %cst_69 {dimension_numbers = #tpu.dot_dimension_numbers<[2], [1], [1], [2], [0, 0, 0, 1, 1, 2], [0], [0]>} : vector<8x8x12xbf16>, vector<8x12x8xbf16>, vector<8x8x8xf32> -> vector<8x8x8xf32>
    %57 = arith.addf %53, %56 : vector<8x8x8xf32>
    %c0_70 = arith.constant 0 : index
    %c1_71 = arith.constant 1 : index
    %c0_72 = arith.constant 0 : index
    %c0_73 = arith.constant 0 : index
    %c1_74 = arith.constant 1 : index
    %c0_75 = arith.constant 0 : index
    %58 = vector.load %arg1[%c0_70, %c1_71, %c0_72, %c0_73, %c1_74, %c0_75] : memref<1x2x2x9x9x12xbf16, #tpu.memory_space<vmem>>, vector<1x1x1x8x8x12xbf16>
    %59 = vector.shape_cast %58 : vector<1x1x1x8x8x12xbf16> to vector<8x8x12xbf16>
    %cst_76 = arith.constant dense<0.000000e+00> : vector<8x8x8xf32>
    %60 = tpu.matmul %59, %24, %cst_76 {dimension_numbers = #tpu.dot_dimension_numbers<[2], [1], [1], [2], [0, 0, 0, 1, 1, 2], [0], [0]>} : vector<8x8x12xbf16>, vector<8x12x8xbf16>, vector<8x8x8xf32> -> vector<8x8x8xf32>
    %61 = arith.addf %57, %60 : vector<8x8x8xf32>
    %c0_77 = arith.constant 0 : index
    %c0_78 = arith.constant 0 : index
    %c0_79 = arith.constant 0 : index
    %c1_80 = arith.constant 1 : index
    %c0_81 = arith.constant 0 : index
    %c0_82 = arith.constant 0 : index
    %62 = vector.load %arg1[%c0_77, %c0_78, %c0_79, %c1_80, %c0_81, %c0_82] : memref<1x2x2x9x9x12xbf16, #tpu.memory_space<vmem>>, vector<1x1x1x8x8x12xbf16>
    %63 = vector.shape_cast %62 : vector<1x1x1x8x8x12xbf16> to vector<8x8x12xbf16>
    %cst_83 = arith.constant dense<0.000000e+00> : vector<8x8x8xf32>
    %64 = tpu.matmul %63, %28, %cst_83 {dimension_numbers = #tpu.dot_dimension_numbers<[2], [1], [1], [2], [0, 0, 0, 1, 1, 2], [0], [0]>} : vector<8x8x12xbf16>, vector<8x12x8xbf16>, vector<8x8x8xf32> -> vector<8x8x8xf32>
    %65 = arith.addf %61, %64 : vector<8x8x8xf32>
    %c0_84 = arith.constant 0 : index
    %c0_85 = arith.constant 0 : index
    %c1_86 = arith.constant 1 : index
    %c1_87 = arith.constant 1 : index
    %c0_88 = arith.constant 0 : index
    %c0_89 = arith.constant 0 : index
    %66 = vector.load %arg1[%c0_84, %c0_85, %c1_86, %c1_87, %c0_88, %c0_89] : memref<1x2x2x9x9x12xbf16, #tpu.memory_space<vmem>>, vector<1x1x1x8x8x12xbf16>
    %67 = vector.shape_cast %66 : vector<1x1x1x8x8x12xbf16> to vector<8x8x12xbf16>
    %cst_90 = arith.constant dense<0.000000e+00> : vector<8x8x8xf32>
    %68 = tpu.matmul %67, %32, %cst_90 {dimension_numbers = #tpu.dot_dimension_numbers<[2], [1], [1], [2], [0, 0, 0, 1, 1, 2], [0], [0]>} : vector<8x8x12xbf16>, vector<8x12x8xbf16>, vector<8x8x8xf32> -> vector<8x8x8xf32>
    %69 = arith.addf %65, %68 : vector<8x8x8xf32>
    %c0_91 = arith.constant 0 : index
    %c0_92 = arith.constant 0 : index
    %c0_93 = arith.constant 0 : index
    %c1_94 = arith.constant 1 : index
    %c1_95 = arith.constant 1 : index
    %c0_96 = arith.constant 0 : index
    %70 = vector.load %arg1[%c0_91, %c0_92, %c0_93, %c1_94, %c1_95, %c0_96] : memref<1x2x2x9x9x12xbf16, #tpu.memory_space<vmem>>, vector<1x1x1x8x8x12xbf16>
    %71 = vector.shape_cast %70 : vector<1x1x1x8x8x12xbf16> to vector<8x8x12xbf16>
    %cst_97 = arith.constant dense<0.000000e+00> : vector<8x8x8xf32>
    %72 = tpu.matmul %71, %36, %cst_97 {dimension_numbers = #tpu.dot_dimension_numbers<[2], [1], [1], [2], [0, 0, 0, 1, 1, 2], [0], [0]>} : vector<8x8x12xbf16>, vector<8x12x8xbf16>, vector<8x8x8xf32> -> vector<8x8x8xf32>
    %73 = arith.addf %69, %72 : vector<8x8x8xf32>
    %74 = vector.shape_cast %0 : vector<1x8xf32> to vector<1x1x8xf32>
    %75 = vector.broadcast %74 : vector<1x1x8xf32> to vector<8x8x8xf32>
    %76 = arith.addf %73, %75 : vector<8x8x8xf32>
    %cst_98 = arith.constant 0.000000e+00 : f32
    %77 = vector.broadcast %cst_98 : f32 to vector<8x8x8xf32>
    %78 = arith.maximumf %76, %77 : vector<8x8x8xf32>
    %79 = arith.truncf %78 : vector<8x8x8xf32> to vector<8x8x8xbf16>
    %c0_99 = arith.constant 0 : index
    %c0_100 = arith.constant 0 : index
    %c0_101 = arith.constant 0 : index
    %c0_102 = arith.constant 0 : index
    %80 = vector.load %arg4[%c0_99, %c0_100, %c0_101, %c0_102] : memref<1x8x8x8xbf16, #tpu.memory_space<vmem>>, vector<1x8x8x8xbf16>
    %81 = vector.shape_cast %80 : vector<1x8x8x8xbf16> to vector<8x8x8xbf16>
    %82 = vector.shape_cast %79 : vector<8x8x8xbf16> to vector<1x8x8x8xbf16>
    tpu.vector_store %arg4[%c0_99, %c0_100, %c0_101, %c0_102], %82 {strides = array<i32>} : memref<1x8x8x8xbf16, #tpu.memory_space<vmem>>, vector<1x8x8x8xbf16>,
    return
  }
  func.func @transform_0(%arg0: i32) -> (i32, i32, i32, i32, i32, i32) {
    %c0_i32 = arith.constant 0 : i32
    %c0_i32_0 = arith.constant 0 : i32
    %c0_i32_1 = arith.constant 0 : i32
    %c0_i32_2 = arith.constant 0 : i32
    %c0_i32_3 = arith.constant 0 : i32
    %c0_i32_4 = arith.constant 0 : i32
    return %arg0, %c0_i32, %c0_i32_0, %c0_i32_1, %c0_i32_2, %c0_i32_3 : i32, i32, i32, i32, i32, i32
  }
  func.func @transform_1(%arg0: i32) -> (i32, i32, i32, i32) {
    %c0_i32 = arith.constant 0 : i32
    %c0_i32_0 = arith.constant 0 : i32
    %c0_i32_1 = arith.constant 0 : i32
    %c0_i32_2 = arith.constant 0 : i32
    %c0_i32_3 = arith.constant 0 : i32
    return %c0_i32, %c0_i32_0, %c0_i32_1, %c0_i32_2 : i32, i32, i32, i32
  }
  func.func @transform_2(%arg0: i32) -> (i32, i32) {
    %c0_i32 = arith.constant 0 : i32
    %c0_i32_0 = arith.constant 0 : i32
    %c0_i32_1 = arith.constant 0 : i32
    return %c0_i32, %c0_i32_0 : i32, i32
  }
  func.func @transform_3(%arg0: i32) -> (i32, i32, i32, i32) {
    %c0_i32 = arith.constant 0 : i32
    %c0_i32_0 = arith.constant 0 : i32
    %c0_i32_1 = arith.constant 0 : i32
    %c0_i32_2 = arith.constant 0 : i32
    return %arg0, %c0_i32, %c0_i32_0, %c0_i32_1 : i32, i32, i32, i32
  }
}

</mosaic_0001>

<llo_original>
// kernel: _pnn_forward.1
$region0: #{_pnn_forward.1}
  #allocation0 [shape = 'u32[]', space=smem, size = 0x4, offset = 0x4, fixed_abs, tag = 'smem constant byte address 0x4 - core index']
  #allocation1 [shape = 'u32[72,128]{1,0:T(1,128)}', space=vmem, size = 0x9000, scoped, tag = 'internal scratch']
  %s0 = inlined_call_operand.vmem [shape: bf16[2,2,2,9,9,12], index: 0, kind: input, shape index: {}]
  %s1 = inlined_call_operand.vmem [shape: bf16[3,3,12,8], index: 1, kind: input, shape index: {}]
  %s2 = inlined_call_operand.vmem [shape: f32[1,8], index: 2, kind: input, shape index: {}]
  %s3 = inlined_call_operand.vmem [shape: bf16[2,8,8,8], index: 3, kind: output, shape index: {}]
  %s4 = sld [smem:[#allocation0]]
  $region45: #{_pnn_forward.1} parent=0
    _
  %s6 = ssub.s32 1, %s4
  %s7 = scalar_select 0, %s6, %s4
  loop: start=0, step=1, limit=4
  $region2: #{_pnn_forward.1} parent=0 // loop_pre_header
    _
  $region3: #{_pnn_forward.1} parent=0 // loop_header
    %s9 = sphi 0, %s13
    %p10 = scmp.ge.s32.totalorder %s9, 4
    %s19 = sphi 0, %s21
    %s22 = sphi 0, %s19
    %s23 = sphi 0, %s22
    %s39 = sphi 0, %s23
    %s43 = sphi 0, %s43
    %s45 = sphi 0, %s43
    %s46 = sphi 0, %s45
    %s60 = sphi 0, %s46
    %s64 = sphi 0, %s64
    %s66 = sphi 0, %s64
    %s67 = sphi 0, %s66
    %s81 = sphi 0, %s67
    %s87 = sphi 0, %s89
    %s90 = sphi 0, %s87
    %s91 = sphi 0, %s90
    %s107 = sphi 0, %s91
  $region4: #{_pnn_forward.1} parent=0 // loop_header_branch
    %12 = sbr.rel (%p10) target = $region8
  $region5: #{_pnn_forward.1} parent=0 // loop_body
    %s14 = ssub.s32 %s9, 1
    %s15 = ssub.s32 %s9, 2
    %s16 = sadd.s32 %s9, 1
    %s17 = ssub.s32 %s9, %s16
    %p18 = scmp.eq.s32.totalorder %s17, 0
    %s20 = sadd.s32 %s19, 1
    %s21 = scalar_select %p18, %s19, %s20
    %p24 = pneg %p18
    %p25 = scmp.eq.s32.totalorder %s9, 1
    %p26 = por %p24, %p25
    %p27 = scmp.ne.s32.totalorder %s19, %s22
    %p28 = scmp.eq.s32.totalorder %s9, 0
    %p29 = por %p27, %p28
    %p30 = scmp.ne.s32.totalorder %s19, %s22
    %p31 = scmp.eq.s32.totalorder %s14, 1
    %p32 = por %p30, %p31
    %p33 = scmp.ne.s32.totalorder %s22, %s23
    %p34 = scmp.eq.s32.totalorder %s14, 0
    %p35 = por %p33, %p34
    %p36 = scmp.ne.s32.totalorder %s22, %s23
    %p37 = scmp.eq.s32.totalorder %s15, 1
    %p38 = por %p36, %p37
    %p40 = scmp.ne.s32.totalorder %s23, %s39
    %p41 = scmp.eq.s32.totalorder %s15, 0
    %p42 = por %p40, %p41
    %s44 = sadd.s32 %s43, 1
    %p47 = scmp.eq.s32.totalorder %s9, 1
    %p48 = scmp.ne.s32.totalorder %s43, %s45
    %p49 = scmp.eq.s32.totalorder %s9, 0
    %p50 = por %p48, %p49
    %p51 = scmp.ne.s32.totalorder %s43, %s45
    %p52 = scmp.eq.s32.totalorder %s14, 1
    %p53 = por %p51, %p52
    %p54 = scmp.ne.s32.totalorder %s45, %s46
    %p55 = scmp.eq.s32.totalorder %s14, 0
    %p56 = por %p54, %p55
    %p57 = scmp.ne.s32.totalorder %s45, %s46
    %p58 = scmp.eq.s32.totalorder %s15, 1
    %p59 = por %p57, %p58
    %p61 = scmp.ne.s32.totalorder %s46, %s60
    %p62 = scmp.eq.s32.totalorder %s15, 0
    %p63 = por %p61, %p62
    %s65 = sadd.s32 %s64, 1
    %p68 = scmp.eq.s32.totalorder %s9, 1
    %p69 = scmp.ne.s32.totalorder %s64, %s66
    %p70 = scmp.eq.s32.totalorder %s9, 0
    %p71 = por %p69, %p70
    %p72 = scmp.ne.s32.totalorder %s64, %s66
    %p73 = scmp.eq.s32.totalorder %s14, 1
    %p74 = por %p72, %p73
    %p75 = scmp.ne.s32.totalorder %s66, %s67
    %p76 = scmp.eq.s32.totalorder %s14, 0
    %p77 = por %p75, %p76
    %p78 = scmp.ne.s32.totalorder %s66, %s67
    %p79 = scmp.eq.s32.totalorder %s15, 1
    %p80 = por %p78, %p79
    %p82 = scmp.ne.s32.totalorder %s67, %s81
    %p83 = scmp.eq.s32.totalorder %s15, 0
    %p84 = por %p82, %p83
    %s85 = ssub.s32 %s9, %s16
    %p86 = scmp.eq.s32.totalorder %s85, 0
    %s88 = sadd.s32 %s87, 1
    %s89 = scalar_select %p86, %s87, %s88
    %p92 = pneg %p86
    %p93 = scmp.eq.s32.totalorder %s9, 1
    %p94 = por %p92, %p93
    %p95 = scmp.ne.s32.totalorder %s87, %s90
    %p96 = scmp.eq.s32.totalorder %s9, 0
    %p97 = por %p95, %p96
    %p98 = scmp.ne.s32.totalorder %s87, %s90
    %p99 = scmp.eq.s32.totalorder %s14, 1
    %p100 = por %p98, %p99
    %p101 = scmp.ne.s32.totalorder %s90, %s91
    %p102 = scmp.eq.s32.totalorder %s14, 0
    %p103 = por %p101, %p102
    %p104 = scmp.ne.s32.totalorder %s90, %s91
    %p105 = scmp.eq.s32.totalorder %s15, 1
    %p106 = por %p104, %p105
    %p108 = scmp.ne.s32.totalorder %s91, %s107
    %p109 = scmp.eq.s32.totalorder %s15, 0
    %p110 = por %p108, %p109
    %p111 = scmp.le.s32.totalorder 1, %s9
    %p112 = scmp.lt.s32.totalorder %s9, 3
    %p113 = pnand %p111, %p112
    %p114 = pneg %p113
    // Predicated region
    $region9: #{_pnn_forward.1} parent=5 // pred_check
      _
    $region10: #{_pnn_forward.1} parent=5 // pred_check_branch
      %116 = sbr.rel (%p113) target = $region12
    $region11: #{_pnn_forward.1} parent=5 // pred_region
      %s117 = ssub.s32 %s9, 1
      // Predicated region
      $region13: #{_pnn_forward.1} parent=11 // pred_check
        %p118 = pneg %p56
      $region14: #{_pnn_forward.1} parent=11 // pred_check_branch
        %120 = sbr.rel (%p118) target = $region16
      $region15: #{_pnn_forward.1} parent=11 // pred_region
        _
      $region16: #{_pnn_forward.1} parent=11 // pred_fallthru
        _
      // Predicated region
      $region17: #{_pnn_forward.1} parent=11 // pred_check
        %p121 = pneg %p77
      $region18: #{_pnn_forward.1} parent=11 // pred_check_branch
        %123 = sbr.rel (%p121) target = $region20
      $region19: #{_pnn_forward.1} parent=11 // pred_region
        _
      $region20: #{_pnn_forward.1} parent=11 // pred_fallthru
        _
    $region12: #{_pnn_forward.1} parent=5 // pred_fallthru
      _
    %p124 = scmp.lt.s32.totalorder %s9, 2
    // Predicated region
    $region21: #{_pnn_forward.1} parent=5 // pred_check
      %p125 = pneg %p124
    $region22: #{_pnn_forward.1} parent=5 // pred_check_branch
      %127 = sbr.rel (%p125) target = $region24
    $region23: #{_pnn_forward.1} parent=5 // pred_region
      // Predicated region
      $region25: #{_pnn_forward.1} parent=23 // pred_check
        %p128 = pneg %p29
      $region26: #{_pnn_forward.1} parent=23 // pred_check_branch
        %130 = sbr.rel (%p128) target = $region28
      $region27: #{_pnn_forward.1} parent=23 // pred_region
        %p131 = scmp.lt.s32.totalorder %s9, 1
        %s132 = scalar_select %p131, %s9, 1
        %s133 = smul.addr %s132, 72
        %s134 = smul.addr %s133, 4
        %s135 = scalar_lea.vmem %s0, %s134
      $region28: #{_pnn_forward.1} parent=23 // pred_fallthru
        _
    $region24: #{_pnn_forward.1} parent=5 // pred_fallthru
      _
    %p136 = scmp.le.s32.totalorder 1, %s9
    %p137 = scmp.lt.s32.totalorder %s9, 3
    %p138 = pnand %p136, %p137
    %p139 = pneg %p138
    // Predicated region
    $region29: #{_pnn_forward.1} parent=5 // pred_check
      _
    $region30: #{_pnn_forward.1} parent=5 // pred_check_branch
      %141 = sbr.rel (%p138) target = $region32
    $region31: #{_pnn_forward.1} parent=5 // pred_region
      %s142 = ssub.s32 %s9, 1
      %p143 = scmp.lt.s32.totalorder %s14, 1
      %s144 = scalar_select %p143, %s14, 1
      %s145 = smul.addr %s144, 72
      %s146 = smul.addr %s145, 4
      %s147 = scalar_lea.vmem %s0, %s146
      %p148 = pneg %p35
      %p149 = pneg %p32
      %p150 = pneg %p56
      %p151 = pneg %p53
      %p152 = pneg %p77
      %p153 = pneg %p74
      %p154 = pneg %p103
      %p155 = pneg %p100
      %p156 = scmp.lt.s32.totalorder %s14, 1
      %s157 = scalar_select %p156, %s14, 1
      %s158 = smul.addr %s157, 8
      %s159 = smul.addr %s158, 4
      %s160 = scalar_lea.vmem %s3, %s159
      %p161 = scmp.lt.s32.totalorder %s14, 1
      %s162 = scalar_select %p161, %s14, 1
      %s163 = smul.addr %s162, 72
      %s164 = smul.addr %s163, 4
      %s165 = scalar_lea.vmem %s0, %s164
      %p166 = scmp.lt.s32.totalorder %s14, 1
      %s167 = scalar_select %p166, %s14, 1
      %s168 = smul.addr %s167, 8
      %s169 = smul.addr %s168, 4
      %s170 = scalar_lea.vmem %s3, %s169
      %v172 = vld [vmem:[%s2] sm:$0x1]
      %v173 = vld [vmem:[%s1] sm:$0xf]
      %v174 = vld [vmem:[%s1 + $0x4] sm:$0x3]
      %s175 = scalar_lea.vmem %s1, 8
      %v176 = vld [vmem:[%s175] sm:$0xf]
      %v177 = vld [vmem:[%s175 + $0x4] sm:$0x3]
      %s178 = scalar_lea.vmem %s1, 16
      %v179 = vld [vmem:[%s178] sm:$0xf]
      %v180 = vld [vmem:[%s178 + $0x4] sm:$0x3]
      %s181 = scalar_lea.vmem %s1, 24
      %v182 = vld [vmem:[%s181] sm:$0xf]
      %v183 = vld [vmem:[%s181 + $0x4] sm:$0x3]
      %s184 = scalar_lea.vmem %s1, 32
      %v185 = vld [vmem:[%s184] sm:$0xf]
      %v186 = vld [vmem:[%s184 + $0x4] sm:$0x3]
      %s187 = scalar_lea.vmem %s1, 40
      %v188 = vld [vmem:[%s187] sm:$0xf]
      %v189 = vld [vmem:[%s187 + $0x4] sm:$0x3]
      %s190 = scalar_lea.vmem %s1, 48
      %v191 = vld [vmem:[%s190] sm:$0xf]
      %v192 = vld [vmem:[%s190 + $0x4] sm:$0x3]
      %s193 = scalar_lea.vmem %s1, 56
      %v194 = vld [vmem:[%s193] sm:$0xf]
      %v195 = vld [vmem:[%s193 + $0x4] sm:$0x3]
      %s196 = scalar_lea.vmem %s1, 64
      %v197 = vld [vmem:[%s196] sm:$0xf]
      %v198 = vld [vmem:[%s196 + $0x4] sm:$0x3]
      %v199 = vld [vmem:[%s165] sm:$0xf]
      %v200 = vld [vmem:[%s165 + $0x8] sm:$0xf]
      %v201 = vld [vmem:[%s165 + $0x10] sm:$0xf]
      %v202 = vld [vmem:[%s165 + $0x18] sm:$0xf]
      %v203 = vld [vmem:[%s165 + $0x20] sm:$0xf]
      %v204 = vld [vmem:[%s165 + $0x28] sm:$0xf]
      %v205 = vld [vmem:[%s165 + $0x30] sm:$0xf]
      %v206 = vld [vmem:[%s165 + $0x38] sm:$0xf]
      %s207 = scalar_lea.vmem %s165, 72
      %v208 = vld [vmem:[%s207] sm:$0xf]
      %v209 = vld [vmem:[%s207 + $0x8] sm:$0xf]
      %v210 = vld [vmem:[%s207 + $0x10] sm:$0xf]
      %v211 = vld [vmem:[%s207 + $0x18] sm:$0xf]
      %v212 = vld [vmem:[%s207 + $0x20] sm:$0xf]
      %v213 = vld [vmem:[%s207 + $0x28] sm:$0xf]
      %v214 = vld [vmem:[%s207 + $0x30] sm:$0xf]
      %v215 = vld [vmem:[%s207 + $0x38] sm:$0xf]
      %v218 = vunpack.c.l.b16 %v176
      %v219 = vunpack.c.l.b16 %v177
      %v220 = vpack.c.b16 %v219, %v218
      %vm221 = vcmask 97280
      %v223 = vsel %vm221, %v208, 0
      %vm225 = vcmask 1045504
      %v227 = vsel %vm225, %v220, 0
      %229 = vmatpush.bf16.msra.mxu0 0
      %230 = vmatpush.bf16.msra.mxu0 0
      %231 = vmatpush.bf16.msra.mxu0 0
      %232 = vmatpush.bf16.msra.mxu0 0
      %233 = vmatpush.bf16.msra.mxu0 0
      %234 = vmatpush.bf16.msra.mxu0 0
      %235 = vmatpush.bf16.msra.mxu0 0
      %236 = vmatpush.bf16.msra.mxu0 %v227
      %237 = vmatmul.bf16.gmra.mxu0 %v223
      %v238 = vpop.f32.mrf.mxu0
      %v239 = vadd.f32 0.0, %v238
      %v240 = vpop.f32.mrf.mxu0
      %241 = vdwg.mxu0
      %v243 = vsel %vm221, %v209, 0
      %245 = vmatpush.bf16.msra.mxu0 0
      %246 = vmatpush.bf16.msra.mxu0 0
      %247 = vmatpush.bf16.msra.mxu0 0
      %248 = vmatpush.bf16.msra.mxu0 0
      %249 = vmatpush.bf16.msra.mxu0 0
      %250 = vmatpush.bf16.msra.mxu0 0
      %251 = vmatpush.bf16.msra.mxu0 0
      %252 = vmatpush.bf16.msra.mxu0 %v227
      %253 = vmatmul.bf16.gmra.mxu0 %v243
      %v254 = vpop.f32.mrf.mxu0
      %v255 = vadd.f32 0.0, %v254
      %v256 = vpop.f32.mrf.mxu0
      %257 = vdwg.mxu0
      %v259 = vsel %vm221, %v210, 0
      %261 = vmatpush.bf16.msra.mxu0 0
      %262 = vmatpush.bf16.msra.mxu0 0
      %263 = vmatpush.bf16.msra.mxu0 0
      %264 = vmatpush.bf16.msra.mxu0 0
      %265 = vmatpush.bf16.msra.mxu0 0
      %266 = vmatpush.bf16.msra.mxu0 0
      %267 = vmatpush.bf16.msra.mxu0 0
      %268 = vmatpush.bf16.msra.mxu0 %v227
      %269 = vmatmul.bf16.gmra.mxu0 %v259
      %v270 = vpop.f32.mrf.mxu0
      %v271 = vadd.f32 0.0, %v270
      %v272 = vpop.f32.mrf.mxu0
      %273 = vdwg.mxu0
      %v275 = vsel %vm221, %v211, 0
      %277 = vmatpush.bf16.msra.mxu0 0
      %278 = vmatpush.bf16.msra.mxu0 0
      %279 = vmatpush.bf16.msra.mxu0 0
      %280 = vmatpush.bf16.msra.mxu0 0
      %281 = vmatpush.bf16.msra.mxu0 0
      %282 = vmatpush.bf16.msra.mxu0 0
      %283 = vmatpush.bf16.msra.mxu0 0
      %284 = vmatpush.bf16.msra.mxu0 %v227
      %285 = vmatmul.bf16.gmra.mxu0 %v275
      %v286 = vpop.f32.mrf.mxu0
      %v287 = vadd.f32 0.0, %v286
      %v288 = vpop.f32.mrf.mxu0
      %289 = vdwg.mxu0
      %v291 = vsel %vm221, %v212, 0
      %293 = vmatpush.bf16.msra.mxu0 0
      %294 = vmatpush.bf16.msra.mxu0 0
      %295 = vmatpush.bf16.msra.mxu0 0
      %296 = vmatpush.bf16.msra.mxu0 0
      %297 = vmatpush.bf16.msra.mxu0 0
      %298 = vmatpush.bf16.msra.mxu0 0
      %299 = vmatpush.bf16.msra.mxu0 0
      %300 = vmatpush.bf16.msra.mxu0 %v227
      %301 = vmatmul.bf16.gmra.mxu0 %v291
      %v302 = vpop.f32.mrf.mxu0
      %v303 = vadd.f32 0.0, %v302
      %v304 = vpop.f32.mrf.mxu0
      %305 = vdwg.mxu0
      %v307 = vsel %vm221, %v213, 0
      %309 = vmatpush.bf16.msra.mxu0 0
      %310 = vmatpush.bf16.msra.mxu0 0
      %311 = vmatpush.bf16.msra.mxu0 0
      %312 = vmatpush.bf16.msra.mxu0 0
      %313 = vmatpush.bf16.msra.mxu0 0
      %314 = vmatpush.bf16.msra.mxu0 0
      %315 = vmatpush.bf16.msra.mxu0 0
      %316 = vmatpush.bf16.msra.mxu0 %v227
      %317 = vmatmul.bf16.gmra.mxu0 %v307
      %v318 = vpop.f32.mrf.mxu0
      %v319 = vadd.f32 0.0, %v318
      %v320 = vpop.f32.mrf.mxu0
      %321 = vdwg.mxu0
      %v323 = vsel %vm221, %v214, 0
      %325 = vmatpush.bf16.msra.mxu0 0
      %326 = vmatpush.bf16.msra.mxu0 0
      %327 = vmatpush.bf16.msra.mxu0 0
      %328 = vmatpush.bf16.msra.mxu0 0
      %329 = vmatpush.bf16.msra.mxu0 0
      %330 = vmatpush.bf16.msra.mxu0 0
      %331 = vmatpush.bf16.msra.mxu0 0
      %332 = vmatpush.bf16.msra.mxu0 %v227
      %333 = vmatmul.bf16.gmra.mxu0 %v323
      %v334 = vpop.f32.mrf.mxu0
      %v335 = vadd.f32 0.0, %v334
      %v336 = vpop.f32.mrf.mxu0
      %337 = vdwg.mxu0
      %v339 = vsel %vm221, %v215, 0
      %341 = vmatpush.bf16.msra.mxu0 0
      %342 = vmatpush.bf16.msra.mxu0 0
      %343 = vmatpush.bf16.msra.mxu0 0
      %344 = vmatpush.bf16.msra.mxu0 0
      %345 = vmatpush.bf16.msra.mxu0 0
      %346 = vmatpush.bf16.msra.mxu0 0
      %347 = vmatpush.bf16.msra.mxu0 0
      %348 = vmatpush.bf16.msra.mxu0 %v227
      %349 = vmatmul.bf16.gmra.mxu0 %v339
      %v350 = vpop.f32.mrf.mxu0
      %v351 = vadd.f32 0.0, %v350
      %v352 = vpop.f32.mrf.mxu0
      %353 = vdwg.mxu0
      %v356 = vunpack.c.l.b16 %v173
      %v357 = vunpack.c.l.b16 %v174
      %v358 = vpack.c.b16 %v357, %v356
      %v360 = vsel %vm221, %v199, 0
      %v363 = vsel %vm225, %v358, 0
      %365 = vmatpush.bf16.msra.mxu0 0
      %366 = vmatpush.bf16.msra.mxu0 0
      %367 = vmatpush.bf16.msra.mxu0 0
      %368 = vmatpush.bf16.msra.mxu0 0
      %369 = vmatpush.bf16.msra.mxu0 0
      %370 = vmatpush.bf16.msra.mxu0 0
      %371 = vmatpush.bf16.msra.mxu0 0
      %372 = vmatpush.bf16.msra.mxu0 %v363
      %373 = vmatmul.bf16.gmra.mxu0 %v360
      %v374 = vpop.f32.mrf.mxu0
      %v375 = vadd.f32 %v239, %v374
      %v376 = vpop.f32.mrf.mxu0
      %377 = vdwg.mxu0
      %v379 = vsel %vm221, %v200, 0
      %381 = vmatpush.bf16.msra.mxu0 0
      %382 = vmatpush.bf16.msra.mxu0 0
      %383 = vmatpush.bf16.msra.mxu0 0
      %384 = vmatpush.bf16.msra.mxu0 0
      %385 = vmatpush.bf16.msra.mxu0 0
      %386 = vmatpush.bf16.msra.mxu0 0
      %387 = vmatpush.bf16.msra.mxu0 0
      %388 = vmatpush.bf16.msra.mxu0 %v363
      %389 = vmatmul.bf16.gmra.mxu0 %v379
      %v390 = vpop.f32.mrf.mxu0
      %v391 = vadd.f32 %v255, %v390
      %v392 = vpop.f32.mrf.mxu0
      %393 = vdwg.mxu0
      %v395 = vsel %vm221, %v201, 0
      %397 = vmatpush.bf16.msra.mxu0 0
      %398 = vmatpush.bf16.msra.mxu0 0
      %399 = vmatpush.bf16.msra.mxu0 0
      %400 = vmatpush.bf16.msra.mxu0 0
      %401 = vmatpush.bf16.msra.mxu0 0
      %402 = vmatpush.bf16.msra.mxu0 0
      %403 = vmatpush.bf16.msra.mxu0 0
      %404 = vmatpush.bf16.msra.mxu0 %v363
      %405 = vmatmul.bf16.gmra.mxu0 %v395
      %v406 = vpop.f32.mrf.mxu0
      %v407 = vadd.f32 %v271, %v406
      %v408 = vpop.f32.mrf.mxu0
      %409 = vdwg.mxu0
      %v411 = vsel %vm221, %v202, 0
      %413 = vmatpush.bf16.msra.mxu0 0
      %414 = vmatpush.bf16.msra.mxu0 0
      %415 = vmatpush.bf16.msra.mxu0 0
      %416 = vmatpush.bf16.msra.mxu0 0
      %417 = vmatpush.bf16.msra.mxu0 0
      %418 = vmatpush.bf16.msra.mxu0 0
      %419 = vmatpush.bf16.msra.mxu0 0
      %420 = vmatpush.bf16.msra.mxu0 %v363
      %421 = vmatmul.bf16.gmra.mxu0 %v411
      %v422 = vpop.f32.mrf.mxu0
      %v423 = vadd.f32 %v287, %v422
      %v424 = vpop.f32.mrf.mxu0
      %425 = vdwg.mxu0
      %v427 = vsel %vm221, %v203, 0
      %429 = vmatpush.bf16.msra.mxu0 0
      %430 = vmatpush.bf16.msra.mxu0 0
      %431 = vmatpush.bf16.msra.mxu0 0
      %432 = vmatpush.bf16.msra.mxu0 0
      %433 = vmatpush.bf16.msra.mxu0 0
      %434 = vmatpush.bf16.msra.mxu0 0
      %435 = vmatpush.bf16.msra.mxu0 0
      %436 = vmatpush.bf16.msra.mxu0 %v363
      %437 = vmatmul.bf16.gmra.mxu0 %v427
      %v438 = vpop.f32.mrf.mxu0
      %v439 = vadd.f32 %v303, %v438
      %v440 = vpop.f32.mrf.mxu0
      %441 = vdwg.mxu0
      %v443 = vsel %vm221, %v204, 0
      %445 = vmatpush.bf16.msra.mxu0 0
      %446 = vmatpush.bf16.msra.mxu0 0
      %447 = vmatpush.bf16.msra.mxu0 0
      %448 = vmatpush.bf16.msra.mxu0 0
      %449 = vmatpush.bf16.msra.mxu0 0
      %450 = vmatpush.bf16.msra.mxu0 0
      %451 = vmatpush.bf16.msra.mxu0 0
      %452 = vmatpush.bf16.msra.mxu0 %v363
      %453 = vmatmul.bf16.gmra.mxu0 %v443
      %v454 = vpop.f32.mrf.mxu0
      %v455 = vadd.f32 %v319, %v454
      %v456 = vpop.f32.mrf.mxu0
      %457 = vdwg.mxu0
      %v459 = vsel %vm221, %v205, 0
      %461 = vmatpush.bf16.msra.mxu0 0
      %462 = vmatpush.bf16.msra.mxu0 0
      %463 = vmatpush.bf16.msra.mxu0 0
      %464 = vmatpush.bf16.msra.mxu0 0
      %465 = vmatpush.bf16.msra.mxu0 0
      %466 = vmatpush.bf16.msra.mxu0 0
      %467 = vmatpush.bf16.msra.mxu0 0
      %468 = vmatpush.bf16.msra.mxu0 %v363
      %469 = vmatmul.bf16.gmra.mxu0 %v459
      %v470 = vpop.f32.mrf.mxu0
      %v471 = vadd.f32 %v335, %v470
      %v472 = vpop.f32.mrf.mxu0
      %473 = vdwg.mxu0
      %v475 = vsel %vm221, %v206, 0
      %477 = vmatpush.bf16.msra.mxu0 0
      %478 = vmatpush.bf16.msra.mxu0 0
      %479 = vmatpush.bf16.msra.mxu0 0
      %480 = vmatpush.bf16.msra.mxu0 0
      %481 = vmatpush.bf16.msra.mxu0 0
      %482 = vmatpush.bf16.msra.mxu0 0
      %483 = vmatpush.bf16.msra.mxu0 0
      %484 = vmatpush.bf16.msra.mxu0 %v363
      %485 = vmatmul.bf16.gmra.mxu0 %v475
      %v486 = vpop.f32.mrf.mxu0
      %v487 = vadd.f32 %v351, %v486
      %v488 = vpop.f32.mrf.mxu0
      %489 = vdwg.mxu0
      %v490 = vld [vmem:[%s165] sm:$0xf]
      %v491 = vld [vmem:[%s165 + $0x4] sm:$0x1]
      %v492 = vld [vmem:[%s165 + $0x8] sm:$0xf]
      %v493 = vld [vmem:[%s165 + $0xc] sm:$0x1]
      %v494 = vld [vmem:[%s165 + $0x10] sm:$0xf]
      %v495 = vld [vmem:[%s165 + $0x14] sm:$0x1]
      %v496 = vld [vmem:[%s165 + $0x18] sm:$0xf]
      %v497 = vld [vmem:[%s165 + $0x1c] sm:$0x1]
      %v498 = vld [vmem:[%s165 + $0x20] sm:$0xf]
      %v499 = vld [vmem:[%s165 + $0x24] sm:$0x1]
      %v500 = vld [vmem:[%s165 + $0x28] sm:$0xf]
      %v501 = vld [vmem:[%s165 + $0x2c] sm:$0x1]
      %v502 = vld [vmem:[%s165 + $0x30] sm:$0xf]
      %v503 = vld [vmem:[%s165 + $0x34] sm:$0x1]
      %v504 = vld [vmem:[%s165 + $0x38] sm:$0xf]
      %v505 = vld [vmem:[%s165 + $0x3c] sm:$0x1]
      %v508 = vunpack.c.l.b16 %v490
      %v509 = vunpack.c.l.b16 %v491
      %v510 = vpack.c.b16 %v509, %v508
      %v512 = vshrl.u32 %v510, 16
      %v514 = vshll.u32 %v510, 16
      %v516 = vrot.slane %v514, 1
      %v517 = vor.u32 %v512, %v516
      %v520 = vunpack.c.l.b16 %v179
      %v521 = vunpack.c.l.b16 %v180
      %v522 = vpack.c.b16 %v521, %v520
      %v524 = vsel %vm221, %v517, 0
      %v527 = vsel %vm225, %v522, 0
      %529 = vmatpush.bf16.msra.mxu0 0
      %530 = vmatpush.bf16.msra.mxu0 0
      %531 = vmatpush.bf16.msra.mxu0 0
      %532 = vmatpush.bf16.msra.mxu0 0
      %533 = vmatpush.bf16.msra.mxu0 0
      %534 = vmatpush.bf16.msra.mxu0 0
      %535 = vmatpush.bf16.msra.mxu0 0
      %536 = vmatpush.bf16.msra.mxu0 %v527
      %537 = vmatmul.bf16.gmra.mxu0 %v524
      %v538 = vpop.f32.mrf.mxu0
      %v539 = vadd.f32 0.0, %v538
      %v540 = vpop.f32.mrf.mxu0
      %541 = vdwg.mxu0
      %v544 = vunpack.c.l.b16 %v492
      %v545 = vunpack.c.l.b16 %v493
      %v546 = vpack.c.b16 %v545, %v544
      %v548 = vshrl.u32 %v546, 16
      %v550 = vshll.u32 %v546, 16
      %v552 = vrot.slane %v550, 1
      %v553 = vor.u32 %v548, %v552
      %v555 = vsel %vm221, %v553, 0
      %557 = vmatpush.bf16.msra.mxu0 0
      %558 = vmatpush.bf16.msra.mxu0 0
      %559 = vmatpush.bf16.msra.mxu0 0
      %560 = vmatpush.bf16.msra.mxu0 0
      %561 = vmatpush.bf16.msra.mxu0 0
      %562 = vmatpush.bf16.msra.mxu0 0
      %563 = vmatpush.bf16.msra.mxu0 0
      %564 = vmatpush.bf16.msra.mxu0 %v527
      %565 = vmatmul.bf16.gmra.mxu0 %v555
      %v566 = vpop.f32.mrf.mxu0
      %v567 = vadd.f32 0.0, %v566
      %v568 = vpop.f32.mrf.mxu0
      %569 = vdwg.mxu0
      %v572 = vunpack.c.l.b16 %v494
      %v573 = vunpack.c.l.b16 %v495
      %v574 = vpack.c.b16 %v573, %v572
      %v576 = vshrl.u32 %v574, 16
      %v578 = vshll.u32 %v574, 16
      %v580 = vrot.slane %v578, 1
      %v581 = vor.u32 %v576, %v580
      %v583 = vsel %vm221, %v581, 0
      %585 = vmatpush.bf16.msra.mxu0 0
      %586 = vmatpush.bf16.msra.mxu0 0
      %587 = vmatpush.bf16.msra.mxu0 0
      %588 = vmatpush.bf16.msra.mxu0 0
      %589 = vmatpush.bf16.msra.mxu0 0
      %590 = vmatpush.bf16.msra.mxu0 0
      %591 = vmatpush.bf16.msra.mxu0 0
      %592 = vmatpush.bf16.msra.mxu0 %v527
      %593 = vmatmul.bf16.gmra.mxu0 %v583
      %v594 = vpop.f32.mrf.mxu0
      %v595 = vadd.f32 0.0, %v594
      %v596 = vpop.f32.mrf.mxu0
      %597 = vdwg.mxu0
      %v600 = vunpack.c.l.b16 %v496
      %v601 = vunpack.c.l.b16 %v497
      %v602 = vpack.c.b16 %v601, %v600
      %v604 = vshrl.u32 %v602, 16
      %v606 = vshll.u32 %v602, 16
      %v608 = vrot.slane %v606, 1
      %v609 = vor.u32 %v604, %v608
      %v611 = vsel %vm221, %v609, 0
      %613 = vmatpush.bf16.msra.mxu0 0
      %614 = vmatpush.bf16.msra.mxu0 0
      %615 = vmatpush.bf16.msra.mxu0 0
      %616 = vmatpush.bf16.msra.mxu0 0
      %617 = vmatpush.bf16.msra.mxu0 0
      %618 = vmatpush.bf16.msra.mxu0 0
      %619 = vmatpush.bf16.msra.mxu0 0
      %620 = vmatpush.bf16.msra.mxu0 %v527
      %621 = vmatmul.bf16.gmra.mxu0 %v611
      %v622 = vpop.f32.mrf.mxu0
      %v623 = vadd.f32 0.0, %v622
      %v624 = vpop.f32.mrf.mxu0
      %625 = vdwg.mxu0
      %v628 = vunpack.c.l.b16 %v498
      %v629 = vunpack.c.l.b16 %v499
      %v630 = vpack.c.b16 %v629, %v628
      %v632 = vshrl.u32 %v630, 16
      %v634 = vshll.u32 %v630, 16
      %v636 = vrot.slane %v634, 1
      %v637 = vor.u32 %v632, %v636
      %v639 = vsel %vm221, %v637, 0
      %641 = vmatpush.bf16.msra.mxu0 0
      %642 = vmatpush.bf16.msra.mxu0 0
      %643 = vmatpush.bf16.msra.mxu0 0
      %644 = vmatpush.bf16.msra.mxu0 0
      %645 = vmatpush.bf16.msra.mxu0 0
      %646 = vmatpush.bf16.msra.mxu0 0
      %647 = vmatpush.bf16.msra.mxu0 0
      %648 = vmatpush.bf16.msra.mxu0 %v527
      %649 = vmatmul.bf16.gmra.mxu0 %v639
      %v650 = vpop.f32.mrf.mxu0
      %v651 = vadd.f32 0.0, %v650
      %v652 = vpop.f32.mrf.mxu0
      %653 = vdwg.mxu0
      %v656 = vunpack.c.l.b16 %v500
      %v657 = vunpack.c.l.b16 %v501
      %v658 = vpack.c.b16 %v657, %v656
      %v660 = vshrl.u32 %v658, 16
      %v662 = vshll.u32 %v658, 16
      %v664 = vrot.slane %v662, 1
      %v665 = vor.u32 %v660, %v664
      %v667 = vsel %vm221, %v665, 0
      %669 = vmatpush.bf16.msra.mxu0 0
      %670 = vmatpush.bf16.msra.mxu0 0
      %671 = vmatpush.bf16.msra.mxu0 0
      %672 = vmatpush.bf16.msra.mxu0 0
      %673 = vmatpush.bf16.msra.mxu0 0
      %674 = vmatpush.bf16.msra.mxu0 0
      %675 = vmatpush.bf16.msra.mxu0 0
      %676 = vmatpush.bf16.msra.mxu0 %v527
      %677 = vmatmul.bf16.gmra.mxu0 %v667
      %v678 = vpop.f32.mrf.mxu0
      %v679 = vadd.f32 0.0, %v678
      %v680 = vpop.f32.mrf.mxu0
      %681 = vdwg.mxu0
      %v684 = vunpack.c.l.b16 %v502
      %v685 = vunpack.c.l.b16 %v503
      %v686 = vpack.c.b16 %v685, %v684
      %v688 = vshrl.u32 %v686, 16
      %v690 = vshll.u32 %v686, 16
      %v692 = vrot.slane %v690, 1
      %v693 = vor.u32 %v688, %v692
      %v695 = vsel %vm221, %v693, 0
      %697 = vmatpush.bf16.msra.mxu0 0
      %698 = vmatpush.bf16.msra.mxu0 0
      %699 = vmatpush.bf16.msra.mxu0 0
      %700 = vmatpush.bf16.msra.mxu0 0
      %701 = vmatpush.bf16.msra.mxu0 0
      %702 = vmatpush.bf16.msra.mxu0 0
      %703 = vmatpush.bf16.msra.mxu0 0
      %704 = vmatpush.bf16.msra.mxu0 %v527
      %705 = vmatmul.bf16.gmra.mxu0 %v695
      %v706 = vpop.f32.mrf.mxu0
      %v707 = vadd.f32 0.0, %v706
      %v708 = vpop.f32.mrf.mxu0
      %709 = vdwg.mxu0
      %v712 = vunpack.c.l.b16 %v504
      %v713 = vunpack.c.l.b16 %v505
      %v714 = vpack.c.b16 %v713, %v712
      %v716 = vshrl.u32 %v714, 16
      %v718 = vshll.u32 %v714, 16
      %v720 = vrot.slane %v718, 1
      %v721 = vor.u32 %v716, %v720
      %v723 = vsel %vm221, %v721, 0
      %725 = vmatpush.bf16.msra.mxu0 0
      %726 = vmatpush.bf16.msra.mxu0 0
      %727 = vmatpush.bf16.msra.mxu0 0
      %728 = vmatpush.bf16.msra.mxu0 0
      %729 = vmatpush.bf16.msra.mxu0 0
      %730 = vmatpush.bf16.msra.mxu0 0
      %731 = vmatpush.bf16.msra.mxu0 0
      %732 = vmatpush.bf16.msra.mxu0 %v527
      %733 = vmatmul.bf16.gmra.mxu0 %v723
      %v734 = vpop.f32.mrf.mxu0
      %v735 = vadd.f32 0.0, %v734
      %v736 = vpop.f32.mrf.mxu0
      %737 = vdwg.mxu0
      %v738 = vadd.f32 %v375, %v539
      %v739 = vadd.f32 %v391, %v567
      %v740 = vadd.f32 %v407, %v595
      %v741 = vadd.f32 %v423, %v623
      %v742 = vadd.f32 %v439, %v651
      %v743 = vadd.f32 %v455, %v679
      %v744 = vadd.f32 %v471, %v707
      %v745 = vadd.f32 %v487, %v735
      %s746 = scalar_lea.vmem %s165, 144
      %v747 = vld [vmem:[%s746] sm:$0xf]
      %v748 = vld [vmem:[%s746 + $0x8] sm:$0xf]
      %v749 = vld [vmem:[%s746 + $0x10] sm:$0xf]
      %v750 = vld [vmem:[%s746 + $0x18] sm:$0xf]
      %v751 = vld [vmem:[%s746 + $0x20] sm:$0xf]
      %v752 = vld [vmem:[%s746 + $0x28] sm:$0xf]
      %v753 = vld [vmem:[%s746 + $0x30] sm:$0xf]
      %v754 = vld [vmem:[%s746 + $0x38] sm:$0xf]
      %v757 = vunpack.c.l.b16 %v182
      %v758 = vunpack.c.l.b16 %v183
      %v759 = vpack.c.b16 %v758, %v757
      %v761 = vsel %vm221, %v747, 0
      %v764 = vsel %vm225, %v759, 0
      %766 = vmatpush.bf16.msra.mxu0 0
      %767 = vmatpush.bf16.msra.mxu0 0
      %768 = vmatpush.bf16.msra.mxu0 0
      %769 = vmatpush.bf16.msra.mxu0 0
      %770 = vmatpush.bf16.msra.mxu0 0
      %771 = vmatpush.bf16.msra.mxu0 0
      %772 = vmatpush.bf16.msra.mxu0 0
      %773 = vmatpush.bf16.msra.mxu0 %v764
      %774 = vmatmul.bf16.gmra.mxu0 %v761
      %v775 = vpop.f32.mrf.mxu0
      %v776 = vadd.f32 0.0, %v775
      %v777 = vpop.f32.mrf.mxu0
      %778 = vdwg.mxu0
      %v780 = vsel %vm221, %v748, 0
      %782 = vmatpush.bf16.msra.mxu0 0
      %783 = vmatpush.bf16.msra.mxu0 0
      %784 = vmatpush.bf16.msra.mxu0 0
      %785 = vmatpush.bf16.msra.mxu0 0
      %786 = vmatpush.bf16.msra.mxu0 0
      %787 = vmatpush.bf16.msra.mxu0 0
      %788 = vmatpush.bf16.msra.mxu0 0
      %789 = vmatpush.bf16.msra.mxu0 %v764
      %790 = vmatmul.bf16.gmra.mxu0 %v780
      %v791 = vpop.f32.mrf.mxu0
      %v792 = vadd.f32 0.0, %v791
      %v793 = vpop.f32.mrf.mxu0
      %794 = vdwg.mxu0
      %v796 = vsel %vm221, %v749, 0
      %798 = vmatpush.bf16.msra.mxu0 0
      %799 = vmatpush.bf16.msra.mxu0 0
      %800 = vmatpush.bf16.msra.mxu0 0
      %801 = vmatpush.bf16.msra.mxu0 0
      %802 = vmatpush.bf16.msra.mxu0 0
      %803 = vmatpush.bf16.msra.mxu0 0
      %804 = vmatpush.bf16.msra.mxu0 0
      %805 = vmatpush.bf16.msra.mxu0 %v764
      %806 = vmatmul.bf16.gmra.mxu0 %v796
      %v807 = vpop.f32.mrf.mxu0
      %v808 = vadd.f32 0.0, %v807
      %v809 = vpop.f32.mrf.mxu0
      %810 = vdwg.mxu0
      %v812 = vsel %vm221, %v750, 0
      %814 = vmatpush.bf16.msra.mxu0 0
      %815 = vmatpush.bf16.msra.mxu0 0
      %816 = vmatpush.bf16.msra.mxu0 0
      %817 = vmatpush.bf16.msra.mxu0 0
      %818 = vmatpush.bf16.msra.mxu0 0
      %819 = vmatpush.bf16.msra.mxu0 0
      %820 = vmatpush.bf16.msra.mxu0 0
      %821 = vmatpush.bf16.msra.mxu0 %v764
      %822 = vmatmul.bf16.gmra.mxu0 %v812
      %v823 = vpop.f32.mrf.mxu0
      %v824 = vadd.f32 0.0, %v823
      %v825 = vpop.f32.mrf.mxu0
      %826 = vdwg.mxu0
      %v828 = vsel %vm221, %v751, 0
      %830 = vmatpush.bf16.msra.mxu0 0
      %831 = vmatpush.bf16.msra.mxu0 0
      %832 = vmatpush.bf16.msra.mxu0 0
      %833 = vmatpush.bf16.msra.mxu0 0
      %834 = vmatpush.bf16.msra.mxu0 0
      %835 = vmatpush.bf16.msra.mxu0 0
      %836 = vmatpush.bf16.msra.mxu0 0
      %837 = vmatpush.bf16.msra.mxu0 %v764
      %838 = vmatmul.bf16.gmra.mxu0 %v828
      %v839 = vpop.f32.mrf.mxu0
      %v840 = vadd.f32 0.0, %v839
      %v841 = vpop.f32.mrf.mxu0
      %842 = vdwg.mxu0
      %v844 = vsel %vm221, %v752, 0
      %846 = vmatpush.bf16.msra.mxu0 0
      %847 = vmatpush.bf16.msra.mxu0 0
      %848 = vmatpush.bf16.msra.mxu0 0
      %849 = vmatpush.bf16.msra.mxu0 0
      %850 = vmatpush.bf16.msra.mxu0 0
      %851 = vmatpush.bf16.msra.mxu0 0
      %852 = vmatpush.bf16.msra.mxu0 0
      %853 = vmatpush.bf16.msra.mxu0 %v764
      %854 = vmatmul.bf16.gmra.mxu0 %v844
      %v855 = vpop.f32.mrf.mxu0
      %v856 = vadd.f32 0.0, %v855
      %v857 = vpop.f32.mrf.mxu0
      %858 = vdwg.mxu0
      %v860 = vsel %vm221, %v753, 0
      %862 = vmatpush.bf16.msra.mxu0 0
      %863 = vmatpush.bf16.msra.mxu0 0
      %864 = vmatpush.bf16.msra.mxu0 0
      %865 = vmatpush.bf16.msra.mxu0 0
      %866 = vmatpush.bf16.msra.mxu0 0
      %867 = vmatpush.bf16.msra.mxu0 0
      %868 = vmatpush.bf16.msra.mxu0 0
      %869 = vmatpush.bf16.msra.mxu0 %v764
      %870 = vmatmul.bf16.gmra.mxu0 %v860
      %v871 = vpop.f32.mrf.mxu0
      %v872 = vadd.f32 0.0, %v871
      %v873 = vpop.f32.mrf.mxu0
      %874 = vdwg.mxu0
      %v876 = vsel %vm221, %v754, 0
      %878 = vmatpush.bf16.msra.mxu0 0
      %879 = vmatpush.bf16.msra.mxu0 0
      %880 = vmatpush.bf16.msra.mxu0 0
      %881 = vmatpush.bf16.msra.mxu0 0
      %882 = vmatpush.bf16.msra.mxu0 0
      %883 = vmatpush.bf16.msra.mxu0 0
      %884 = vmatpush.bf16.msra.mxu0 0
      %885 = vmatpush.bf16.msra.mxu0 %v764
      %886 = vmatmul.bf16.gmra.mxu0 %v876
      %v887 = vpop.f32.mrf.mxu0
      %v888 = vadd.f32 0.0, %v887
      %v889 = vpop.f32.mrf.mxu0
      %890 = vdwg.mxu0
      %v891 = vadd.f32 %v738, %v776
      %v892 = vadd.f32 %v739, %v792
      %v893 = vadd.f32 %v740, %v808
      %v894 = vadd.f32 %v741, %v824
      %v895 = vadd.f32 %v742, %v840
      %v896 = vadd.f32 %v743, %v856
      %v897 = vadd.f32 %v744, %v872
      %v898 = vadd.f32 %v745, %v888
      %s899 = scalar_lea.vmem %s165, 216
      %v900 = vld [vmem:[%s899] sm:$0xf]
      %v901 = vld [vmem:[%s899 + $0x8] sm:$0xf]
      %v902 = vld [vmem:[%s899 + $0x10] sm:$0xf]
      %v903 = vld [vmem:[%s899 + $0x18] sm:$0xf]
      %v904 = vld [vmem:[%s899 + $0x20] sm:$0xf]
      %v905 = vld [vmem:[%s899 + $0x28] sm:$0xf]
      %v906 = vld [vmem:[%s899 + $0x30] sm:$0xf]
      %v907 = vld [vmem:[%s899 + $0x38] sm:$0xf]
      %v910 = vunpack.c.l.b16 %v185
      %v911 = vunpack.c.l.b16 %v186
      %v912 = vpack.c.b16 %v911, %v910
      %v914 = vsel %vm221, %v900, 0
      %v917 = vsel %vm225, %v912, 0
      %919 = vmatpush.bf16.msra.mxu0 0
      %920 = vmatpush.bf16.msra.mxu0 0
      %921 = vmatpush.bf16.msra.mxu0 0
      %922 = vmatpush.bf16.msra.mxu0 0
      %923 = vmatpush.bf16.msra.mxu0 0
      %924 = vmatpush.bf16.msra.mxu0 0
      %925 = vmatpush.bf16.msra.mxu0 0
      %926 = vmatpush.bf16.msra.mxu0 %v917
      %927 = vmatmul.bf16.gmra.mxu0 %v914
      %v928 = vpop.f32.mrf.mxu0
      %v929 = vadd.f32 0.0, %v928
      %v930 = vpop.f32.mrf.mxu0
      %931 = vdwg.mxu0
      %v933 = vsel %vm221, %v901, 0
      %935 = vmatpush.bf16.msra.mxu0 0
      %936 = vmatpush.bf16.msra.mxu0 0
      %937 = vmatpush.bf16.msra.mxu0 0
      %938 = vmatpush.bf16.msra.mxu0 0
      %939 = vmatpush.bf16.msra.mxu0 0
      %940 = vmatpush.bf16.msra.mxu0 0
      %941 = vmatpush.bf16.msra.mxu0 0
      %942 = vmatpush.bf16.msra.mxu0 %v917
      %943 = vmatmul.bf16.gmra.mxu0 %v933
      %v944 = vpop.f32.mrf.mxu0
      %v945 = vadd.f32 0.0, %v944
      %v946 = vpop.f32.mrf.mxu0
      %947 = vdwg.mxu0
      %v949 = vsel %vm221, %v902, 0
      %951 = vmatpush.bf16.msra.mxu0 0
      %952 = vmatpush.bf16.msra.mxu0 0
      %953 = vmatpush.bf16.msra.mxu0 0
      %954 = vmatpush.bf16.msra.mxu0 0
      %955 = vmatpush.bf16.msra.mxu0 0
      %956 = vmatpush.bf16.msra.mxu0 0
      %957 = vmatpush.bf16.msra.mxu0 0
      %958 = vmatpush.bf16.msra.mxu0 %v917
      %959 = vmatmul.bf16.gmra.mxu0 %v949
      %v960 = vpop.f32.mrf.mxu0
      %v961 = vadd.f32 0.0, %v960
      %v962 = vpop.f32.mrf.mxu0
      %963 = vdwg.mxu0
      %v965 = vsel %vm221, %v903, 0
      %967 = vmatpush.bf16.msra.mxu0 0
      %968 = vmatpush.bf16.msra.mxu0 0
      %969 = vmatpush.bf16.msra.mxu0 0
      %970 = vmatpush.bf16.msra.mxu0 0
      %971 = vmatpush.bf16.msra.mxu0 0
      %972 = vmatpush.bf16.msra.mxu0 0
      %973 = vmatpush.bf16.msra.mxu0 0
      %974 = vmatpush.bf16.msra.mxu0 %v917
      %975 = vmatmul.bf16.gmra.mxu0 %v965
      %v976 = vpop.f32.mrf.mxu0
      %v977 = vadd.f32 0.0, %v976
      %v978 = vpop.f32.mrf.mxu0
      %979 = vdwg.mxu0
      %v981 = vsel %vm221, %v904, 0
      %983 = vmatpush.bf16.msra.mxu0 0
      %984 = vmatpush.bf16.msra.mxu0 0
      %985 = vmatpush.bf16.msra.mxu0 0
      %986 = vmatpush.bf16.msra.mxu0 0
      %987 = vmatpush.bf16.msra.mxu0 0
      %988 = vmatpush.bf16.msra.mxu0 0
      %989 = vmatpush.bf16.msra.mxu0 0
      %990 = vmatpush.bf16.msra.mxu0 %v917
      %991 = vmatmul.bf16.gmra.mxu0 %v981
      %v992 = vpop.f32.mrf.mxu0
      %v993 = vadd.f32 0.0, %v992
      %v994 = vpop.f32.mrf.mxu0
      %995 = vdwg.mxu0
      %v997 = vsel %vm221, %v905, 0
      %999 = vmatpush.bf16.msra.mxu0 0
      %1000 = vmatpush.bf16.msra.mxu0 0
      %1001 = vmatpush.bf16.msra.mxu0 0
      %1002 = vmatpush.bf16.msra.mxu0 0
      %1003 = vmatpush.bf16.msra.mxu0 0
      %1004 = vmatpush.bf16.msra.mxu0 0
      %1005 = vmatpush.bf16.msra.mxu0 0
      %1006 = vmatpush.bf16.msra.mxu0 %v917
      %1007 = vmatmul.bf16.gmra.mxu0 %v997
      %v1008 = vpop.f32.mrf.mxu0
      %v1009 = vadd.f32 0.0, %v1008
      %v1010 = vpop.f32.mrf.mxu0
      %1011 = vdwg.mxu0
      %v1013 = vsel %vm221, %v906, 0
      %1015 = vmatpush.bf16.msra.mxu0 0
      %1016 = vmatpush.bf16.msra.mxu0 0
      %1017 = vmatpush.bf16.msra.mxu0 0
      %1018 = vmatpush.bf16.msra.mxu0 0
      %1019 = vmatpush.bf16.msra.mxu0 0
      %1020 = vmatpush.bf16.msra.mxu0 0
      %1021 = vmatpush.bf16.msra.mxu0 0
      %1022 = vmatpush.bf16.msra.mxu0 %v917
      %1023 = vmatmul.bf16.gmra.mxu0 %v1013
      %v1024 = vpop.f32.mrf.mxu0
      %v1025 = vadd.f32 0.0, %v1024
      %v1026 = vpop.f32.mrf.mxu0
      %1027 = vdwg.mxu0
      %v1029 = vsel %vm221, %v907, 0
      %1031 = vmatpush.bf16.msra.mxu0 0
      %1032 = vmatpush.bf16.msra.mxu0 0
      %1033 = vmatpush.bf16.msra.mxu0 0
      %1034 = vmatpush.bf16.msra.mxu0 0
      %1035 = vmatpush.bf16.msra.mxu0 0
      %1036 = vmatpush.bf16.msra.mxu0 0
      %1037 = vmatpush.bf16.msra.mxu0 0
      %1038 = vmatpush.bf16.msra.mxu0 %v917
      %1039 = vmatmul.bf16.gmra.mxu0 %v1029
      %v1040 = vpop.f32.mrf.mxu0
      %v1041 = vadd.f32 0.0, %v1040
      %v1042 = vpop.f32.mrf.mxu0
      %1043 = vdwg.mxu0
      %v1044 = vadd.f32 %v891, %v929
      %v1045 = vadd.f32 %v892, %v945
      %v1046 = vadd.f32 %v893, %v961
      %v1047 = vadd.f32 %v894, %v977
      %v1048 = vadd.f32 %v895, %v993
      %v1049 = vadd.f32 %v896, %v1009
      %v1050 = vadd.f32 %v897, %v1025
      %v1051 = vadd.f32 %v898, %v1041
      %v1052 = vld [vmem:[%s746] sm:$0xf]
      %v1053 = vld [vmem:[%s746 + $0x4] sm:$0x1]
      %v1054 = vld [vmem:[%s746 + $0x8] sm:$0xf]
      %v1055 = vld [vmem:[%s746 + $0xc] sm:$0x1]
      %v1056 = vld [vmem:[%s746 + $0x10] sm:$0xf]
      %v1057 = vld [vmem:[%s746 + $0x14] sm:$0x1]
      %v1058 = vld [vmem:[%s746 + $0x18] sm:$0xf]
      %v1059 = vld [vmem:[%s746 + $0x1c] sm:$0x1]
      %v1060 = vld [vmem:[%s746 + $0x20] sm:$0xf]
      %v1061 = vld [vmem:[%s746 + $0x24] sm:$0x1]
      %v1062 = vld [vmem:[%s746 + $0x28] sm:$0xf]
      %v1063 = vld [vmem:[%s746 + $0x2c] sm:$0x1]
      %v1064 = vld [vmem:[%s746 + $0x30] sm:$0xf]
      %v1065 = vld [vmem:[%s746 + $0x34] sm:$0x1]
      %v1066 = vld [vmem:[%s746 + $0x38] sm:$0xf]
      %v1067 = vld [vmem:[%s746 + $0x3c] sm:$0x1]
      %v1070 = vunpack.c.l.b16 %v1052
      %v1071 = vunpack.c.l.b16 %v1053
      %v1072 = vpack.c.b16 %v1071, %v1070
      %v1074 = vshrl.u32 %v1072, 16
      %v1076 = vshll.u32 %v1072, 16
      %v1078 = vrot.slane %v1076, 1
      %v1079 = vor.u32 %v1074, %v1078
      %v1082 = vunpack.c.l.b16 %v188
      %v1083 = vunpack.c.l.b16 %v189
      %v1084 = vpack.c.b16 %v1083, %v1082
      %v1086 = vsel %vm221, %v1079, 0
      %v1089 = vsel %vm225, %v1084, 0
      %1091 = vmatpush.bf16.msra.mxu0 0
      %1092 = vmatpush.bf16.msra.mxu0 0
      %1093 = vmatpush.bf16.msra.mxu0 0
      %1094 = vmatpush.bf16.msra.mxu0 0
      %1095 = vmatpush.bf16.msra.mxu0 0
      %1096 = vmatpush.bf16.msra.mxu0 0
      %1097 = vmatpush.bf16.msra.mxu0 0
      %1098 = vmatpush.bf16.msra.mxu0 %v1089
      %1099 = vmatmul.bf16.gmra.mxu0 %v1086
      %v1100 = vpop.f32.mrf.mxu0
      %v1101 = vadd.f32 0.0, %v1100
      %v1102 = vpop.f32.mrf.mxu0
      %1103 = vdwg.mxu0
      %v1106 = vunpack.c.l.b16 %v1054
      %v1107 = vunpack.c.l.b16 %v1055
      %v1108 = vpack.c.b16 %v1107, %v1106
      %v1110 = vshrl.u32 %v1108, 16
      %v1112 = vshll.u32 %v1108, 16
      %v1114 = vrot.slane %v1112, 1
      %v1115 = vor.u32 %v1110, %v1114
      %v1117 = vsel %vm221, %v1115, 0
      %1119 = vmatpush.bf16.msra.mxu0 0
      %1120 = vmatpush.bf16.msra.mxu0 0
      %1121 = vmatpush.bf16.msra.mxu0 0
      %1122 = vmatpush.bf16.msra.mxu0 0
      %1123 = vmatpush.bf16.msra.mxu0 0
      %1124 = vmatpush.bf16.msra.mxu0 0
      %1125 = vmatpush.bf16.msra.mxu0 0
      %1126 = vmatpush.bf16.msra.mxu0 %v1089
      %1127 = vmatmul.bf16.gmra.mxu0 %v1117
      %v1128 = vpop.f32.mrf.mxu0
      %v1129 = vadd.f32 0.0, %v1128
      %v1130 = vpop.f32.mrf.mxu0
      %1131 = vdwg.mxu0
      %v1134 = vunpack.c.l.b16 %v1056
      %v1135 = vunpack.c.l.b16 %v1057
      %v1136 = vpack.c.b16 %v1135, %v1134
      %v1138 = vshrl.u32 %v1136, 16
      %v1140 = vshll.u32 %v1136, 16
      %v1142 = vrot.slane %v1140, 1
      %v1143 = vor.u32 %v1138, %v1142
      %v1145 = vsel %vm221, %v1143, 0
      %1147 = vmatpush.bf16.msra.mxu0 0
      %1148 = vmatpush.bf16.msra.mxu0 0
      %1149 = vmatpush.bf16.msra.mxu0 0
      %1150 = vmatpush.bf16.msra.mxu0 0
      %1151 = vmatpush.bf16.msra.mxu0 0
      %1152 = vmatpush.bf16.msra.mxu0 0
      %1153 = vmatpush.bf16.msra.mxu0 0
      %1154 = vmatpush.bf16.msra.mxu0 %v1089
      %1155 = vmatmul.bf16.gmra.mxu0 %v1145
      %v1156 = vpop.f32.mrf.mxu0
      %v1157 = vadd.f32 0.0, %v1156
      %v1158 = vpop.f32.mrf.mxu0
      %1159 = vdwg.mxu0
      %v1162 = vunpack.c.l.b16 %v1058
      %v1163 = vunpack.c.l.b16 %v1059
      %v1164 = vpack.c.b16 %v1163, %v1162
      %v1166 = vshrl.u32 %v1164, 16
      %v1168 = vshll.u32 %v1164, 16
      %v1170 = vrot.slane %v1168, 1
      %v1171 = vor.u32 %v1166, %v1170
      %v1173 = vsel %vm221, %v1171, 0
      %1175 = vmatpush.bf16.msra.mxu0 0
      %1176 = vmatpush.bf16.msra.mxu0 0
      %1177 = vmatpush.bf16.msra.mxu0 0
      %1178 = vmatpush.bf16.msra.mxu0 0
      %1179 = vmatpush.bf16.msra.mxu0 0
      %1180 = vmatpush.bf16.msra.mxu0 0
      %1181 = vmatpush.bf16.msra.mxu0 0
      %1182 = vmatpush.bf16.msra.mxu0 %v1089
      %1183 = vmatmul.bf16.gmra.mxu0 %v1173
      %v1184 = vpop.f32.mrf.mxu0
      %v1185 = vadd.f32 0.0, %v1184
      %v1186 = vpop.f32.mrf.mxu0
      %1187 = vdwg.mxu0
      %v1190 = vunpack.c.l.b16 %v1060
      %v1191 = vunpack.c.l.b16 %v1061
      %v1192 = vpack.c.b16 %v1191, %v1190
      %v1194 = vshrl.u32 %v1192, 16
      %v1196 = vshll.u32 %v1192, 16
      %v1198 = vrot.slane %v1196, 1
      %v1199 = vor.u32 %v1194, %v1198
      %v1201 = vsel %vm221, %v1199, 0
      %1203 = vmatpush.bf16.msra.mxu0 0
      %1204 = vmatpush.bf16.msra.mxu0 0
      %1205 = vmatpush.bf16.msra.mxu0 0
      %1206 = vmatpush.bf16.msra.mxu0 0
      %1207 = vmatpush.bf16.msra.mxu0 0
      %1208 = vmatpush.bf16.msra.mxu0 0
      %1209 = vmatpush.bf16.msra.mxu0 0
      %1210 = vmatpush.bf16.msra.mxu0 %v1089
      %1211 = vmatmul.bf16.gmra.mxu0 %v1201
      %v1212 = vpop.f32.mrf.mxu0
      %v1213 = vadd.f32 0.0, %v1212
      %v1214 = vpop.f32.mrf.mxu0
      %1215 = vdwg.mxu0
      %v1218 = vunpack.c.l.b16 %v1062
      %v1219 = vunpack.c.l.b16 %v1063
      %v1220 = vpack.c.b16 %v1219, %v1218
      %v1222 = vshrl.u32 %v1220, 16
      %v1224 = vshll.u32 %v1220, 16
      %v1226 = vrot.slane %v1224, 1
      %v1227 = vor.u32 %v1222, %v1226
      %v1229 = vsel %vm221, %v1227, 0
      %1231 = vmatpush.bf16.msra.mxu0 0
      %1232 = vmatpush.bf16.msra.mxu0 0
      %1233 = vmatpush.bf16.msra.mxu0 0
      %1234 = vmatpush.bf16.msra.mxu0 0
      %1235 = vmatpush.bf16.msra.mxu0 0
      %1236 = vmatpush.bf16.msra.mxu0 0
      %1237 = vmatpush.bf16.msra.mxu0 0
      %1238 = vmatpush.bf16.msra.mxu0 %v1089
      %1239 = vmatmul.bf16.gmra.mxu0 %v1229
      %v1240 = vpop.f32.mrf.mxu0
      %v1241 = vadd.f32 0.0, %v1240
      %v1242 = vpop.f32.mrf.mxu0
      %1243 = vdwg.mxu0
      %v1246 = vunpack.c.l.b16 %v1064
      %v1247 = vunpack.c.l.b16 %v1065
      %v1248 = vpack.c.b16 %v1247, %v1246
      %v1250 = vshrl.u32 %v1248, 16
      %v1252 = vshll.u32 %v1248, 16
      %v1254 = vrot.slane %v1252, 1
      %v1255 = vor.u32 %v1250, %v1254
      %v1257 = vsel %vm221, %v1255, 0
      %1259 = vmatpush.bf16.msra.mxu0 0
      %1260 = vmatpush.bf16.msra.mxu0 0
      %1261 = vmatpush.bf16.msra.mxu0 0
      %1262 = vmatpush.bf16.msra.mxu0 0
      %1263 = vmatpush.bf16.msra.mxu0 0
      %1264 = vmatpush.bf16.msra.mxu0 0
      %1265 = vmatpush.bf16.msra.mxu0 0
      %1266 = vmatpush.bf16.msra.mxu0 %v1089
      %1267 = vmatmul.bf16.gmra.mxu0 %v1257
      %v1268 = vpop.f32.mrf.mxu0
      %v1269 = vadd.f32 0.0, %v1268
      %v1270 = vpop.f32.mrf.mxu0
      %1271 = vdwg.mxu0
      %v1274 = vunpack.c.l.b16 %v1066
      %v1275 = vunpack.c.l.b16 %v1067
      %v1276 = vpack.c.b16 %v1275, %v1274
      %v1278 = vshrl.u32 %v1276, 16
      %v1280 = vshll.u32 %v1276, 16
      %v1282 = vrot.slane %v1280, 1
      %v1283 = vor.u32 %v1278, %v1282
      %v1285 = vsel %vm221, %v1283, 0
      %1287 = vmatpush.bf16.msra.mxu0 0
      %1288 = vmatpush.bf16.msra.mxu0 0
      %1289 = vmatpush.bf16.msra.mxu0 0
      %1290 = vmatpush.bf16.msra.mxu0 0
      %1291 = vmatpush.bf16.msra.mxu0 0
      %1292 = vmatpush.bf16.msra.mxu0 0
      %1293 = vmatpush.bf16.msra.mxu0 0
      %1294 = vmatpush.bf16.msra.mxu0 %v1089
      %1295 = vmatmul.bf16.gmra.mxu0 %v1285
      %v1296 = vpop.f32.mrf.mxu0
      %v1297 = vadd.f32 0.0, %v1296
      %v1298 = vpop.f32.mrf.mxu0
      %1299 = vdwg.mxu0
      %v1300 = vadd.f32 %v1044, %v1101
      %v1301 = vadd.f32 %v1045, %v1129
      %v1302 = vadd.f32 %v1046, %v1157
      %v1303 = vadd.f32 %v1047, %v1185
      %v1304 = vadd.f32 %v1048, %v1213
      %v1305 = vadd.f32 %v1049, %v1241
      %v1306 = vadd.f32 %v1050, %v1269
      %v1307 = vadd.f32 %v1051, %v1297
      %s1308 = scalar_lea.vmem %s165, 8
      %v1309 = vld [vmem:[%s1308] sm:$0xf]
      %v1310 = vld [vmem:[%s1308 + $0x8] sm:$0xf]
      %v1311 = vld [vmem:[%s1308 + $0x10] sm:$0xf]
      %v1312 = vld [vmem:[%s1308 + $0x18] sm:$0xf]
      %v1313 = vld [vmem:[%s1308 + $0x20] sm:$0xf]
      %v1314 = vld [vmem:[%s1308 + $0x28] sm:$0xf]
      %v1315 = vld [vmem:[%s1308 + $0x30] sm:$0xf]
      %v1316 = vld [vmem:[%s1308 + $0x38] sm:$0xf]
      %v1319 = vunpack.c.l.b16 %v191
      %v1320 = vunpack.c.l.b16 %v192
      %v1321 = vpack.c.b16 %v1320, %v1319
      %v1323 = vsel %vm221, %v1309, 0
      %v1326 = vsel %vm225, %v1321, 0
      %1328 = vmatpush.bf16.msra.mxu0 0
      %1329 = vmatpush.bf16.msra.mxu0 0
      %1330 = vmatpush.bf16.msra.mxu0 0
      %1331 = vmatpush.bf16.msra.mxu0 0
      %1332 = vmatpush.bf16.msra.mxu0 0
      %1333 = vmatpush.bf16.msra.mxu0 0
      %1334 = vmatpush.bf16.msra.mxu0 0
      %1335 = vmatpush.bf16.msra.mxu0 %v1326
      %1336 = vmatmul.bf16.gmra.mxu0 %v1323
      %v1337 = vpop.f32.mrf.mxu0
      %v1338 = vadd.f32 0.0, %v1337
      %v1339 = vpop.f32.mrf.mxu0
      %1340 = vdwg.mxu0
      %v1342 = vsel %vm221, %v1310, 0
      %1344 = vmatpush.bf16.msra.mxu0 0
      %1345 = vmatpush.bf16.msra.mxu0 0
      %1346 = vmatpush.bf16.msra.mxu0 0
      %1347 = vmatpush.bf16.msra.mxu0 0
      %1348 = vmatpush.bf16.msra.mxu0 0
      %1349 = vmatpush.bf16.msra.mxu0 0
      %1350 = vmatpush.bf16.msra.mxu0 0
      %1351 = vmatpush.bf16.msra.mxu0 %v1326
      %1352 = vmatmul.bf16.gmra.mxu0 %v1342
      %v1353 = vpop.f32.mrf.mxu0
      %v1354 = vadd.f32 0.0, %v1353
      %v1355 = vpop.f32.mrf.mxu0
      %1356 = vdwg.mxu0
      %v1358 = vsel %vm221, %v1311, 0
      %1360 = vmatpush.bf16.msra.mxu0 0
      %1361 = vmatpush.bf16.msra.mxu0 0
      %1362 = vmatpush.bf16.msra.mxu0 0
      %1363 = vmatpush.bf16.msra.mxu0 0
      %1364 = vmatpush.bf16.msra.mxu0 0
      %1365 = vmatpush.bf16.msra.mxu0 0
      %1366 = vmatpush.bf16.msra.mxu0 0
      %1367 = vmatpush.bf16.msra.mxu0 %v1326
      %1368 = vmatmul.bf16.gmra.mxu0 %v1358
      %v1369 = vpop.f32.mrf.mxu0
      %v1370 = vadd.f32 0.0, %v1369
      %v1371 = vpop.f32.mrf.mxu0
      %1372 = vdwg.mxu0
      %v1374 = vsel %vm221, %v1312, 0
      %1376 = vmatpush.bf16.msra.mxu0 0
      %1377 = vmatpush.bf16.msra.mxu0 0
      %1378 = vmatpush.bf16.msra.mxu0 0
      %1379 = vmatpush.bf16.msra.mxu0 0
      %1380 = vmatpush.bf16.msra.mxu0 0
      %1381 = vmatpush.bf16.msra.mxu0 0
      %1382 = vmatpush.bf16.msra.mxu0 0
      %1383 = vmatpush.bf16.msra.mxu0 %v1326
      %1384 = vmatmul.bf16.gmra.mxu0 %v1374
      %v1385 = vpop.f32.mrf.mxu0
      %v1386 = vadd.f32 0.0, %v1385
      %v1387 = vpop.f32.mrf.mxu0
      %1388 = vdwg.mxu0
      %v1390 = vsel %vm221, %v1313, 0
      %1392 = vmatpush.bf16.msra.mxu0 0
      %1393 = vmatpush.bf16.msra.mxu0 0
      %1394 = vmatpush.bf16.msra.mxu0 0
      %1395 = vmatpush.bf16.msra.mxu0 0
      %1396 = vmatpush.bf16.msra.mxu0 0
      %1397 = vmatpush.bf16.msra.mxu0 0
      %1398 = vmatpush.bf16.msra.mxu0 0
      %1399 = vmatpush.bf16.msra.mxu0 %v1326
      %1400 = vmatmul.bf16.gmra.mxu0 %v1390
      %v1401 = vpop.f32.mrf.mxu0
      %v1402 = vadd.f32 0.0, %v1401
      %v1403 = vpop.f32.mrf.mxu0
      %1404 = vdwg.mxu0
      %v1406 = vsel %vm221, %v1314, 0
      %1408 = vmatpush.bf16.msra.mxu0 0
      %1409 = vmatpush.bf16.msra.mxu0 0
      %1410 = vmatpush.bf16.msra.mxu0 0
      %1411 = vmatpush.bf16.msra.mxu0 0
      %1412 = vmatpush.bf16.msra.mxu0 0
      %1413 = vmatpush.bf16.msra.mxu0 0
      %1414 = vmatpush.bf16.msra.mxu0 0
      %1415 = vmatpush.bf16.msra.mxu0 %v1326
      %1416 = vmatmul.bf16.gmra.mxu0 %v1406
      %v1417 = vpop.f32.mrf.mxu0
      %v1418 = vadd.f32 0.0, %v1417
      %v1419 = vpop.f32.mrf.mxu0
      %1420 = vdwg.mxu0
      %v1422 = vsel %vm221, %v1315, 0
      %1424 = vmatpush.bf16.msra.mxu0 0
      %1425 = vmatpush.bf16.msra.mxu0 0
      %1426 = vmatpush.bf16.msra.mxu0 0
      %1427 = vmatpush.bf16.msra.mxu0 0
      %1428 = vmatpush.bf16.msra.mxu0 0
      %1429 = vmatpush.bf16.msra.mxu0 0
      %1430 = vmatpush.bf16.msra.mxu0 0
      %1431 = vmatpush.bf16.msra.mxu0 %v1326
      %1432 = vmatmul.bf16.gmra.mxu0 %v1422
      %v1433 = vpop.f32.mrf.mxu0
      %v1434 = vadd.f32 0.0, %v1433
      %v1435 = vpop.f32.mrf.mxu0
      %1436 = vdwg.mxu0
      %v1438 = vsel %vm221, %v1316, 0
      %1440 = vmatpush.bf16.msra.mxu0 0
      %1441 = vmatpush.bf16.msra.mxu0 0
      %1442 = vmatpush.bf16.msra.mxu0 0
      %1443 = vmatpush.bf16.msra.mxu0 0
      %1444 = vmatpush.bf16.msra.mxu0 0
      %1445 = vmatpush.bf16.msra.mxu0 0
      %1446 = vmatpush.bf16.msra.mxu0 0
      %1447 = vmatpush.bf16.msra.mxu0 %v1326
      %1448 = vmatmul.bf16.gmra.mxu0 %v1438
      %v1449 = vpop.f32.mrf.mxu0
      %v1450 = vadd.f32 0.0, %v1449
      %v1451 = vpop.f32.mrf.mxu0
      %1452 = vdwg.mxu0
      %v1453 = vadd.f32 %v1300, %v1338
      %v1454 = vadd.f32 %v1301, %v1354
      %v1455 = vadd.f32 %v1302, %v1370
      %v1456 = vadd.f32 %v1303, %v1386
      %v1457 = vadd.f32 %v1304, %v1402
      %v1458 = vadd.f32 %v1305, %v1418
      %v1459 = vadd.f32 %v1306, %v1434
      %v1460 = vadd.f32 %v1307, %v1450
      %s1461 = scalar_lea.vmem %s165, 80
      %v1462 = vld [vmem:[%s1461] sm:$0xf]
      %v1463 = vld [vmem:[%s1461 + $0x8] sm:$0xf]
      %v1464 = vld [vmem:[%s1461 + $0x10] sm:$0xf]
      %v1465 = vld [vmem:[%s1461 + $0x18] sm:$0xf]
      %v1466 = vld [vmem:[%s1461 + $0x20] sm:$0xf]
      %v1467 = vld [vmem:[%s1461 + $0x28] sm:$0xf]
      %v1468 = vld [vmem:[%s1461 + $0x30] sm:$0xf]
      %v1469 = vld [vmem:[%s1461 + $0x38] sm:$0xf]
      %v1472 = vunpack.c.l.b16 %v194
      %v1473 = vunpack.c.l.b16 %v195
      %v1474 = vpack.c.b16 %v1473, %v1472
      %v1476 = vsel %vm221, %v1462, 0
      %v1479 = vsel %vm225, %v1474, 0
      %1481 = vmatpush.bf16.msra.mxu0 0
      %1482 = vmatpush.bf16.msra.mxu0 0
      %1483 = vmatpush.bf16.msra.mxu0 0
      %1484 = vmatpush.bf16.msra.mxu0 0
      %1485 = vmatpush.bf16.msra.mxu0 0
      %1486 = vmatpush.bf16.msra.mxu0 0
      %1487 = vmatpush.bf16.msra.mxu0 0
      %1488 = vmatpush.bf16.msra.mxu0 %v1479
      %1489 = vmatmul.bf16.gmra.mxu0 %v1476
      %v1490 = vpop.f32.mrf.mxu0
      %v1491 = vadd.f32 0.0, %v1490
      %v1492 = vpop.f32.mrf.mxu0
      %1493 = vdwg.mxu0
      %v1495 = vsel %vm221, %v1463, 0
      %1497 = vmatpush.bf16.msra.mxu0 0
      %1498 = vmatpush.bf16.msra.mxu0 0
      %1499 = vmatpush.bf16.msra.mxu0 0
      %1500 = vmatpush.bf16.msra.mxu0 0
      %1501 = vmatpush.bf16.msra.mxu0 0
      %1502 = vmatpush.bf16.msra.mxu0 0
      %1503 = vmatpush.bf16.msra.mxu0 0
      %1504 = vmatpush.bf16.msra.mxu0 %v1479
      %1505 = vmatmul.bf16.gmra.mxu0 %v1495
      %v1506 = vpop.f32.mrf.mxu0
      %v1507 = vadd.f32 0.0, %v1506
      %v1508 = vpop.f32.mrf.mxu0
      %1509 = vdwg.mxu0
      %v1511 = vsel %vm221, %v1464, 0
      %1513 = vmatpush.bf16.msra.mxu0 0
      %1514 = vmatpush.bf16.msra.mxu0 0
      %1515 = vmatpush.bf16.msra.mxu0 0
      %1516 = vmatpush.bf16.msra.mxu0 0
      %1517 = vmatpush.bf16.msra.mxu0 0
      %1518 = vmatpush.bf16.msra.mxu0 0
      %1519 = vmatpush.bf16.msra.mxu0 0
      %1520 = vmatpush.bf16.msra.mxu0 %v1479
      %1521 = vmatmul.bf16.gmra.mxu0 %v1511
      %v1522 = vpop.f32.mrf.mxu0
      %v1523 = vadd.f32 0.0, %v1522
      %v1524 = vpop.f32.mrf.mxu0
      %1525 = vdwg.mxu0
      %v1527 = vsel %vm221, %v1465, 0
      %1529 = vmatpush.bf16.msra.mxu0 0
      %1530 = vmatpush.bf16.msra.mxu0 0
      %1531 = vmatpush.bf16.msra.mxu0 0
      %1532 = vmatpush.bf16.msra.mxu0 0
      %1533 = vmatpush.bf16.msra.mxu0 0
      %1534 = vmatpush.bf16.msra.mxu0 0
      %1535 = vmatpush.bf16.msra.mxu0 0
      %1536 = vmatpush.bf16.msra.mxu0 %v1479
      %1537 = vmatmul.bf16.gmra.mxu0 %v1527
      %v1538 = vpop.f32.mrf.mxu0
      %v1539 = vadd.f32 0.0, %v1538
      %v1540 = vpop.f32.mrf.mxu0
      %1541 = vdwg.mxu0
      %v1543 = vsel %vm221, %v1466, 0
      %1545 = vmatpush.bf16.msra.mxu0 0
      %1546 = vmatpush.bf16.msra.mxu0 0
      %1547 = vmatpush.bf16.msra.mxu0 0
      %1548 = vmatpush.bf16.msra.mxu0 0
      %1549 = vmatpush.bf16.msra.mxu0 0
      %1550 = vmatpush.bf16.msra.mxu0 0
      %1551 = vmatpush.bf16.msra.mxu0 0
      %1552 = vmatpush.bf16.msra.mxu0 %v1479
      %1553 = vmatmul.bf16.gmra.mxu0 %v1543
      %v1554 = vpop.f32.mrf.mxu0
      %v1555 = vadd.f32 0.0, %v1554
      %v1556 = vpop.f32.mrf.mxu0
      %1557 = vdwg.mxu0
      %v1559 = vsel %vm221, %v1467, 0
      %1561 = vmatpush.bf16.msra.mxu0 0
      %1562 = vmatpush.bf16.msra.mxu0 0
      %1563 = vmatpush.bf16.msra.mxu0 0
      %1564 = vmatpush.bf16.msra.mxu0 0
      %1565 = vmatpush.bf16.msra.mxu0 0
      %1566 = vmatpush.bf16.msra.mxu0 0
      %1567 = vmatpush.bf16.msra.mxu0 0
      %1568 = vmatpush.bf16.msra.mxu0 %v1479
      %1569 = vmatmul.bf16.gmra.mxu0 %v1559
      %v1570 = vpop.f32.mrf.mxu0
      %v1571 = vadd.f32 0.0, %v1570
      %v1572 = vpop.f32.mrf.mxu0
      %1573 = vdwg.mxu0
      %v1575 = vsel %vm221, %v1468, 0
      %1577 = vmatpush.bf16.msra.mxu0 0
      %1578 = vmatpush.bf16.msra.mxu0 0
      %1579 = vmatpush.bf16.msra.mxu0 0
      %1580 = vmatpush.bf16.msra.mxu0 0
      %1581 = vmatpush.bf16.msra.mxu0 0
      %1582 = vmatpush.bf16.msra.mxu0 0
      %1583 = vmatpush.bf16.msra.mxu0 0
      %1584 = vmatpush.bf16.msra.mxu0 %v1479
      %1585 = vmatmul.bf16.gmra.mxu0 %v1575
      %v1586 = vpop.f32.mrf.mxu0
      %v1587 = vadd.f32 0.0, %v1586
      %v1588 = vpop.f32.mrf.mxu0
      %1589 = vdwg.mxu0
      %v1591 = vsel %vm221, %v1469, 0
      %1593 = vmatpush.bf16.msra.mxu0 0
      %1594 = vmatpush.bf16.msra.mxu0 0
      %1595 = vmatpush.bf16.msra.mxu0 0
      %1596 = vmatpush.bf16.msra.mxu0 0
      %1597 = vmatpush.bf16.msra.mxu0 0
      %1598 = vmatpush.bf16.msra.mxu0 0
      %1599 = vmatpush.bf16.msra.mxu0 0
      %1600 = vmatpush.bf16.msra.mxu0 %v1479
      %1601 = vmatmul.bf16.gmra.mxu0 %v1591
      %v1602 = vpop.f32.mrf.mxu0
      %v1603 = vadd.f32 0.0, %v1602
      %v1604 = vpop.f32.mrf.mxu0
      %1605 = vdwg.mxu0
      %v1606 = vadd.f32 %v1453, %v1491
      %v1607 = vadd.f32 %v1454, %v1507
      %v1608 = vadd.f32 %v1455, %v1523
      %v1609 = vadd.f32 %v1456, %v1539
      %v1610 = vadd.f32 %v1457, %v1555
      %v1611 = vadd.f32 %v1458, %v1571
      %v1612 = vadd.f32 %v1459, %v1587
      %v1613 = vadd.f32 %v1460, %v1603
      %v1614 = vld [vmem:[%s1308] sm:$0xf]
      %v1615 = vld [vmem:[%s1308 + $0x4] sm:$0x1]
      %v1616 = vld [vmem:[%s1308 + $0x8] sm:$0xf]
      %v1617 = vld [vmem:[%s1308 + $0xc] sm:$0x1]
      %v1618 = vld [vmem:[%s1308 + $0x10] sm:$0xf]
      %v1619 = vld [vmem:[%s1308 + $0x14] sm:$0x1]
      %v1620 = vld [vmem:[%s1308 + $0x18] sm:$0xf]
      %v1621 = vld [vmem:[%s1308 + $0x1c] sm:$0x1]
      %v1622 = vld [vmem:[%s1308 + $0x20] sm:$0xf]
      %v1623 = vld [vmem:[%s1308 + $0x24] sm:$0x1]
      %v1624 = vld [vmem:[%s1308 + $0x28] sm:$0xf]
      %v1625 = vld [vmem:[%s1308 + $0x2c] sm:$0x1]
      %v1626 = vld [vmem:[%s1308 + $0x30] sm:$0xf]
      %v1627 = vld [vmem:[%s1308 + $0x34] sm:$0x1]
      %v1628 = vld [vmem:[%s1308 + $0x38] sm:$0xf]
      %v1629 = vld [vmem:[%s1308 + $0x3c] sm:$0x1]
      %v1632 = vunpack.c.l.b16 %v1614
      %v1633 = vunpack.c.l.b16 %v1615
      %v1634 = vpack.c.b16 %v1633, %v1632
      %v1636 = vshrl.u32 %v1634, 16
      %v1638 = vshll.u32 %v1634, 16
      %v1640 = vrot.slane %v1638, 1
      %v1641 = vor.u32 %v1636, %v1640
      %v1644 = vunpack.c.l.b16 %v197
      %v1645 = vunpack.c.l.b16 %v198
      %v1646 = vpack.c.b16 %v1645, %v1644
      %v1648 = vsel %vm221, %v1641, 0
      %v1651 = vsel %vm225, %v1646, 0
      %1653 = vmatpush.bf16.msra.mxu0 0
      %1654 = vmatpush.bf16.msra.mxu0 0
      %1655 = vmatpush.bf16.msra.mxu0 0
      %1656 = vmatpush.bf16.msra.mxu0 0
      %1657 = vmatpush.bf16.msra.mxu0 0
      %1658 = vmatpush.bf16.msra.mxu0 0
      %1659 = vmatpush.bf16.msra.mxu0 0
      %1660 = vmatpush.bf16.msra.mxu0 %v1651
      %1661 = vmatmul.bf16.gmra.mxu0 %v1648
      %v1662 = vpop.f32.mrf.mxu0
      %v1663 = vadd.f32 0.0, %v1662
      %v1664 = vpop.f32.mrf.mxu0
      %1665 = vdwg.mxu0
      %v1668 = vunpack.c.l.b16 %v1616
      %v1669 = vunpack.c.l.b16 %v1617
      %v1670 = vpack.c.b16 %v1669, %v1668
      %v1672 = vshrl.u32 %v1670, 16
      %v1674 = vshll.u32 %v1670, 16
      %v1676 = vrot.slane %v1674, 1
      %v1677 = vor.u32 %v1672, %v1676
      %v1679 = vsel %vm221, %v1677, 0
      %1681 = vmatpush.bf16.msra.mxu0 0
      %1682 = vmatpush.bf16.msra.mxu0 0
      %1683 = vmatpush.bf16.msra.mxu0 0
      %1684 = vmatpush.bf16.msra.mxu0 0
      %1685 = vmatpush.bf16.msra.mxu0 0
      %1686 = vmatpush.bf16.msra.mxu0 0
      %1687 = vmatpush.bf16.msra.mxu0 0
      %1688 = vmatpush.bf16.msra.mxu0 %v1651
      %1689 = vmatmul.bf16.gmra.mxu0 %v1679
      %v1690 = vpop.f32.mrf.mxu0
      %v1691 = vadd.f32 0.0, %v1690
      %v1692 = vpop.f32.mrf.mxu0
      %1693 = vdwg.mxu0
      %v1696 = vunpack.c.l.b16 %v1618
      %v1697 = vunpack.c.l.b16 %v1619
      %v1698 = vpack.c.b16 %v1697, %v1696
      %v1700 = vshrl.u32 %v1698, 16
      %v1702 = vshll.u32 %v1698, 16
      %v1704 = vrot.slane %v1702, 1
      %v1705 = vor.u32 %v1700, %v1704
      %v1707 = vsel %vm221, %v1705, 0
      %1709 = vmatpush.bf16.msra.mxu0 0
      %1710 = vmatpush.bf16.msra.mxu0 0
      %1711 = vmatpush.bf16.msra.mxu0 0
      %1712 = vmatpush.bf16.msra.mxu0 0
      %1713 = vmatpush.bf16.msra.mxu0 0
      %1714 = vmatpush.bf16.msra.mxu0 0
      %1715 = vmatpush.bf16.msra.mxu0 0
      %1716 = vmatpush.bf16.msra.mxu0 %v1651
      %1717 = vmatmul.bf16.gmra.mxu0 %v1707
      %v1718 = vpop.f32.mrf.mxu0
      %v1719 = vadd.f32 0.0, %v1718
      %v1720 = vpop.f32.mrf.mxu0
      %1721 = vdwg.mxu0
      %v1724 = vunpack.c.l.b16 %v1620
      %v1725 = vunpack.c.l.b16 %v1621
      %v1726 = vpack.c.b16 %v1725, %v1724
      %v1728 = vshrl.u32 %v1726, 16
      %v1730 = vshll.u32 %v1726, 16
      %v1732 = vrot.slane %v1730, 1
      %v1733 = vor.u32 %v1728, %v1732
      %v1735 = vsel %vm221, %v1733, 0
      %1737 = vmatpush.bf16.msra.mxu0 0
      %1738 = vmatpush.bf16.msra.mxu0 0
      %1739 = vmatpush.bf16.msra.mxu0 0
      %1740 = vmatpush.bf16.msra.mxu0 0
      %1741 = vmatpush.bf16.msra.mxu0 0
      %1742 = vmatpush.bf16.msra.mxu0 0
      %1743 = vmatpush.bf16.msra.mxu0 0
      %1744 = vmatpush.bf16.msra.mxu0 %v1651
      %1745 = vmatmul.bf16.gmra.mxu0 %v1735
      %v1746 = vpop.f32.mrf.mxu0
      %v1747 = vadd.f32 0.0, %v1746
      %v1748 = vpop.f32.mrf.mxu0
      %1749 = vdwg.mxu0
      %v1752 = vunpack.c.l.b16 %v1622
      %v1753 = vunpack.c.l.b16 %v1623
      %v1754 = vpack.c.b16 %v1753, %v1752
      %v1756 = vshrl.u32 %v1754, 16
      %v1758 = vshll.u32 %v1754, 16
      %v1760 = vrot.slane %v1758, 1
      %v1761 = vor.u32 %v1756, %v1760
      %v1763 = vsel %vm221, %v1761, 0
      %1765 = vmatpush.bf16.msra.mxu0 0
      %1766 = vmatpush.bf16.msra.mxu0 0
      %1767 = vmatpush.bf16.msra.mxu0 0
      %1768 = vmatpush.bf16.msra.mxu0 0
      %1769 = vmatpush.bf16.msra.mxu0 0
      %1770 = vmatpush.bf16.msra.mxu0 0
      %1771 = vmatpush.bf16.msra.mxu0 0
      %1772 = vmatpush.bf16.msra.mxu0 %v1651
      %1773 = vmatmul.bf16.gmra.mxu0 %v1763
      %v1774 = vpop.f32.mrf.mxu0
      %v1775 = vadd.f32 0.0, %v1774
      %v1776 = vpop.f32.mrf.mxu0
      %1777 = vdwg.mxu0
      %v1780 = vunpack.c.l.b16 %v1624
      %v1781 = vunpack.c.l.b16 %v1625
      %v1782 = vpack.c.b16 %v1781, %v1780
      %v1784 = vshrl.u32 %v1782, 16
      %v1786 = vshll.u32 %v1782, 16
      %v1788 = vrot.slane %v1786, 1
      %v1789 = vor.u32 %v1784, %v1788
      %v1791 = vsel %vm221, %v1789, 0
      %1793 = vmatpush.bf16.msra.mxu0 0
      %1794 = vmatpush.bf16.msra.mxu0 0
      %1795 = vmatpush.bf16.msra.mxu0 0
      %1796 = vmatpush.bf16.msra.mxu0 0
      %1797 = vmatpush.bf16.msra.mxu0 0
      %1798 = vmatpush.bf16.msra.mxu0 0
      %1799 = vmatpush.bf16.msra.mxu0 0
      %1800 = vmatpush.bf16.msra.mxu0 %v1651
      %1801 = vmatmul.bf16.gmra.mxu0 %v1791
      %v1802 = vpop.f32.mrf.mxu0
      %v1803 = vadd.f32 0.0, %v1802
      %v1804 = vpop.f32.mrf.mxu0
      %1805 = vdwg.mxu0
      %v1808 = vunpack.c.l.b16 %v1626
      %v1809 = vunpack.c.l.b16 %v1627
      %v1810 = vpack.c.b16 %v1809, %v1808
      %v1812 = vshrl.u32 %v1810, 16
      %v1814 = vshll.u32 %v1810, 16
      %v1816 = vrot.slane %v1814, 1
      %v1817 = vor.u32 %v1812, %v1816
      %v1819 = vsel %vm221, %v1817, 0
      %1821 = vmatpush.bf16.msra.mxu0 0
      %1822 = vmatpush.bf16.msra.mxu0 0
      %1823 = vmatpush.bf16.msra.mxu0 0
      %1824 = vmatpush.bf16.msra.mxu0 0
      %1825 = vmatpush.bf16.msra.mxu0 0
      %1826 = vmatpush.bf16.msra.mxu0 0
      %1827 = vmatpush.bf16.msra.mxu0 0
      %1828 = vmatpush.bf16.msra.mxu0 %v1651
      %1829 = vmatmul.bf16.gmra.mxu0 %v1819
      %v1830 = vpop.f32.mrf.mxu0
      %v1831 = vadd.f32 0.0, %v1830
      %v1832 = vpop.f32.mrf.mxu0
      %1833 = vdwg.mxu0
      %v1836 = vunpack.c.l.b16 %v1628
      %v1837 = vunpack.c.l.b16 %v1629
      %v1838 = vpack.c.b16 %v1837, %v1836
      %v1840 = vshrl.u32 %v1838, 16
      %v1842 = vshll.u32 %v1838, 16
      %v1844 = vrot.slane %v1842, 1
      %v1845 = vor.u32 %v1840, %v1844
      %v1847 = vsel %vm221, %v1845, 0
      %1849 = vmatpush.bf16.msra.mxu0 0
      %1850 = vmatpush.bf16.msra.mxu0 0
      %1851 = vmatpush.bf16.msra.mxu0 0
      %1852 = vmatpush.bf16.msra.mxu0 0
      %1853 = vmatpush.bf16.msra.mxu0 0
      %1854 = vmatpush.bf16.msra.mxu0 0
      %1855 = vmatpush.bf16.msra.mxu0 0
      %1856 = vmatpush.bf16.msra.mxu0 %v1651
      %1857 = vmatmul.bf16.gmra.mxu0 %v1847
      %v1858 = vpop.f32.mrf.mxu0
      %v1859 = vadd.f32 0.0, %v1858
      %v1860 = vpop.f32.mrf.mxu0
      %1861 = vdwg.mxu0
      %v1862 = vadd.f32 %v1606, %v1663
      %v1863 = vadd.f32 %v1607, %v1691
      %v1864 = vadd.f32 %v1608, %v1719
      %v1865 = vadd.f32 %v1609, %v1747
      %v1866 = vadd.f32 %v1610, %v1775
      %v1867 = vadd.f32 %v1611, %v1803
      %v1868 = vadd.f32 %v1612, %v1831
      %v1869 = vadd.f32 %v1613, %v1859
      %v1871 = vperm.slane %v172, 0
      %v1873 = vadd.f32 %v1862, %v1871
      %v1874 = vadd.f32 %v1863, %v1871
      %v1875 = vadd.f32 %v1864, %v1871
      %v1876 = vadd.f32 %v1865, %v1871
      %v1877 = vadd.f32 %v1866, %v1871
      %v1878 = vadd.f32 %v1867, %v1871
      %v1879 = vadd.f32 %v1868, %v1871
      %v1880 = vadd.f32 %v1869, %v1871
      %v1881 = vmax.f32 %v1873, 0.0
      %v1882 = vmax.f32 %v1874, 0.0
      %v1883 = vmax.f32 %v1875, 0.0
      %v1884 = vmax.f32 %v1876, 0.0
      %v1885 = vmax.f32 %v1877, 0.0
      %v1886 = vmax.f32 %v1878, 0.0
      %v1887 = vmax.f32 %v1879, 0.0
      %v1888 = vmax.f32 %v1880, 0.0
      %v1889 = vpack.c.bf16 %v1881, %v1881
      %v1890 = vpack.c.bf16 %v1882, %v1882
      %v1891 = vpack.c.bf16 %v1883, %v1883
      %v1892 = vpack.c.bf16 %v1884, %v1884
      %v1893 = vpack.c.bf16 %v1885, %v1885
      %v1894 = vpack.c.bf16 %v1886, %v1886
      %v1895 = vpack.c.bf16 %v1887, %v1887
      %v1896 = vpack.c.bf16 %v1888, %v1888
      %vm1897 = vcmask 60416
      %1898 = vst.msk [vmem:[%s170] sm:$0xf] %vm1897, %v1889
      %1899 = vst.msk [vmem:[%s170 + $0x4] sm:$0xf] %vm1897, %v1890
      %1900 = vst.msk [vmem:[%s170 + $0x8] sm:$0xf] %vm1897, %v1891
      %1901 = vst.msk [vmem:[%s170 + $0xc] sm:$0xf] %vm1897, %v1892
      %1902 = vst.msk [vmem:[%s170 + $0x10] sm:$0xf] %vm1897, %v1893
      %1903 = vst.msk [vmem:[%s170 + $0x14] sm:$0xf] %vm1897, %v1894
      %1904 = vst.msk [vmem:[%s170 + $0x18] sm:$0xf] %vm1897, %v1895
      %1905 = vst.msk [vmem:[%s170 + $0x1c] sm:$0xf] %vm1897, %v1896
      %p1906 = scmp.lt.s32.totalorder %s14, 1
      %s1907 = scalar_select %p1906, %s14, 1
      %s1908 = smul.addr %s1907, 8
      %s1909 = smul.addr %s1908, 4
      %s1910 = scalar_lea.vmem %s3, %s1909
      // Predicated region
      $region33: #{_pnn_forward.1} parent=31 // pred_check
        %p1911 = pneg %p100
      $region34: #{_pnn_forward.1} parent=31 // pred_check_branch
        %1913 = sbr.rel (%p1911) target = $region36
      $region35: #{_pnn_forward.1} parent=31 // pred_region
        _
      $region36: #{_pnn_forward.1} parent=31 // pred_fallthru
        _
    $region32: #{_pnn_forward.1} parent=5 // pred_fallthru
      _
    %p1914 = scmp.le.s32.totalorder 2, %s9
    // Predicated region
    $region37: #{_pnn_forward.1} parent=5 // pred_check
      %p1915 = pneg %p1914
    $region38: #{_pnn_forward.1} parent=5 // pred_check_branch
      %1917 = sbr.rel (%p1915) target = $region40
    $region39: #{_pnn_forward.1} parent=5 // pred_region
      %s1918 = ssub.s32 %s9, 2
      // Predicated region
      $region41: #{_pnn_forward.1} parent=39 // pred_check
        %p1919 = pneg %p106
      $region42: #{_pnn_forward.1} parent=39 // pred_check_branch
        %1921 = sbr.rel (%p1919) target = $region44
      $region43: #{_pnn_forward.1} parent=39 // pred_region
        %p1922 = scmp.lt.s32.totalorder %s15, 1
        %s1923 = scalar_select %p1922, %s15, 1
        %s1924 = smul.addr %s1923, 8
        %s1925 = smul.addr %s1924, 4
        %s1926 = scalar_lea.vmem %s3, %s1925
      $region44: #{_pnn_forward.1} parent=39 // pred_fallthru
        _
    $region40: #{_pnn_forward.1} parent=5 // pred_fallthru
      _
  $region6: #{_pnn_forward.1} parent=0 // loop_footer
    %s13 = sadd.s32 1, %s9
  $region7: #{_pnn_forward.1} parent=0 // loop_footer_branch
    %8 = sbr.rel target = $region3
  $region8: #{_pnn_forward.1} parent=0 // loop_exit
    _

</llo_original>
